<compile_context>
chip_gen: v5e
topology: v5e:2x2
jax: 0.10.0
libtpu: 0.0.40
codegen_flags: <defaults>
</compile_context>

<pallas_src>
import jax
import jax.numpy as jnp
from jax.experimental import pallas as pl
from jax.experimental.pallas import tpu as pltpu

_LANE = 128
_TB_CAP = 2048                      # largest batch tile (rows) we will use
_VMEM_LIMIT = 48 * 1024 * 1024      # fits v5e/v6e (128 MiB) and v7x (64 MiB)


def _mlp_kernel(x_ref,
                w1_ref, b1_ref,
                w2_ref, b2_ref,
                w3_ref, b3_ref,
                w4_ref, b4_ref,
                w5_ref, b5_ref,
                o_ref):
    """Entire 5-layer MLP for one (TB, in_dim) batch tile."""
    h = x_ref[...].astype(jnp.float32)
    layers = ((w1_ref, b1_ref, False),
              (w2_ref, b2_ref, False),
              (w3_ref, b3_ref, False),
              (w4_ref, b4_ref, False),
              (w5_ref, b5_ref, True))
    for w_ref, b_ref, is_last in layers:
        # bf16 operands -> MXU, fp32 accumulate; bias/ReLU stay fp32 (VPU).
        h = jnp.dot(h.astype(jnp.bfloat16), w_ref[...],
                    preferred_element_type=jnp.float32) + b_ref[...]
        if not is_last:
            h = jnp.maximum(h, 0.0)
    o_ref[...] = h.astype(o_ref.dtype)   # (TB, 128) lane-dense store


def _round_up(n, m):
    return ((n + m - 1) // m) * m


def _cdiv(a, b):
    return -(-a // b)


def _choose_tiling(batch, cap=_TB_CAP):
    """Largest tile <= cap; prefer an even number of grid steps (v7x 2 TCs)."""
    tb = min(cap, _round_up(batch, 8))
    n_tiles = _cdiv(batch, tb)
    if n_tiles > 1 and n_tiles % 2 == 1:
        n_tiles += 1
        tb = _round_up(_cdiv(batch, n_tiles), 8)
        n_tiles = _cdiv(batch, tb)
    return tb, n_tiles


def _pack_params(params, out_pad):
    """Weights -> bf16 (halves weight HBM traffic), biases -> fp32 [1, out].
    The last layer's output columns are zero-padded to `out_pad` lanes so the
    kernel's output store is unmasked and lane-dense."""
    flat = []
    n = len(params)
    for idx, (w, b) in enumerate(params):
        w = jnp.asarray(w, jnp.float32)
        b = jnp.asarray(b, jnp.float32).reshape(1, -1)
        if idx == n - 1 and w.shape[1] < out_pad:
            pad_c = out_pad - w.shape[1]
            w = jnp.pad(w, ((0, 0), (0, pad_c)))
            b = jnp.pad(b, ((0, 0), (0, pad_c)))
        flat.append(w.astype(jnp.bfloat16))
        flat.append(b)
    return flat


def output_network_forward(x, params, *, batch_tile=None):
    """params: list of (W [in, out] fp32, b [1, out] fp32) for the 5 layers."""
    x = jnp.asarray(x)
    B, in_dim = x.shape
    out_dim = params[-1][0].shape[1]
    out_pad = _round_up(max(out_dim, _LANE), _LANE)

    if batch_tile is not None:
        tb = _round_up(min(batch_tile, max(B, 8)), 8)
        n_tiles = _cdiv(B, tb)
    else:
        tb, n_tiles = _choose_tiling(B)
    bp = tb * n_tiles
    xp = jnp.pad(x, ((0, bp - B), (0, 0))) if bp != B else x

    flat_params = _pack_params(params, out_pad)

    def _x_idx(i):
        return (i, 0)

    def _const_idx(i):        # weights/biases stay VMEM-resident across steps
        return (0, 0)

    def _weight_specs(single_buffer):
        specs = []
        for arr in flat_params:
            if single_buffer and hasattr(pl, "Buffered"):
                try:
                    specs.append(pl.BlockSpec(arr.shape, _const_idx,
                                              pipeline_mode=pl.Buffered(1)))
                    continue
                except TypeError:
                    pass
            specs.append(pl.BlockSpec(arr.shape, _const_idx))
        return specs

    flops = 2 * bp * sum(w.shape[0] * w.shape[1] for w, _ in params)
    bytes_accessed = (xp.size * xp.dtype.itemsize
                      + sum(a.size * a.dtype.itemsize for a in flat_params)
                      + bp * out_pad * 4)

    def _run(single_buffer):
        call = pl.pallas_call(
            _mlp_kernel,
            out_shape=jax.ShapeDtypeStruct((bp, out_pad), jnp.float32),
            grid=(n_tiles,),
            in_specs=[pl.BlockSpec((tb, in_dim), _x_idx)]
                     + _weight_specs(single_buffer),
            out_specs=pl.BlockSpec((tb, out_pad), _x_idx),
            compiler_params=pltpu.CompilerParams(
                dimension_semantics=("parallel",),     # v7x: 2 TCs share batch
                vmem_limit_bytes=_VMEM_LIMIT),
            cost_estimate=pl.CostEstimate(
                flops=flops, transcendentals=0, bytes_accessed=bytes_accessed),
        )
        return call(xp, *flat_params)

    try:
        out = _run(single_buffer=True)
    except Exception:
        # Fall back to default (double-buffered) resident weights if this JAX
        # build rejects pl.Buffered(1) on a constant-index_map BlockSpec.
        out = _run(single_buffer=False)

    # TODO(synk): for the tiny-B per-decode-step path, keep the ~372 KB of bf16
    # weights VMEM-resident across calls (P10 cross-call semaphore/VMEM future)
    # instead of re-DMAing them every ~3-MFLOP forward.
    return out[:B, :out_dim]


def init_params(key, input_dim, output_dim):
    """Mimics PyTorch nn.Linear default init (U[-1/sqrt(fan_in), +1/sqrt(fan_in)])."""
    dims = [input_dim,
            int(input_dim * 0.8),
            int(input_dim * 0.4),
            int(input_dim * 0.1),
            int(input_dim * 0.01),
            output_dim]
    params = []
    for i in range(5):
        fan_in, fan_out = dims[i], dims[i + 1]
        key, kw, kb = jax.random.split(key, 3)
        bound = 1.0 / (fan_in ** 0.5)
        w = jax.random.uniform(kw, (fan_in, fan_out), jnp.float32, -bound, bound)
        b = jax.random.uniform(kb, (1, fan_out), jnp.float32, -bound, bound)
        params.append((w, b))
    return params


def reference_forward(x, params):
    """Pure-JAX reference with the SAME bf16-operand / fp32-accumulate recipe."""
    h = jnp.asarray(x, jnp.float32)
    for i, (w, b) in enumerate(params):
        h = jnp.dot(h.astype(jnp.bfloat16), w.astype(jnp.bfloat16),
                    preferred_element_type=jnp.float32) + b
        if i < len(params) - 1:
            h = jnp.maximum(h, 0.0)
    return h


if __name__ == "__main__":
    key = jax.random.PRNGKey(0)
    input_dim = 200      # -> hidden dims 160, 80, 20, 2
    output_dim = 8
    batch = 64

    kx, kp = jax.random.split(key)
    x = jax.random.normal(kx, (batch, input_dim), jnp.float32)
    params = init_params(kp, input_dim, output_dim)

    out = jax.block_until_ready(output_network_forward(x, params))
    ref = reference_forward(x, params)

    assert out.shape == (batch, output_dim)
    assert out.dtype == jnp.float32
    assert jnp.allclose(out, ref, atol=2e-3, rtol=2e-3), "mismatch vs reference"

    print("KERNEL_OK")
</pallas_src>

<mosaic_0001>
module attributes {stable_mosaic.version = 11 : i64} {
  func.func @_mlp_kernel(%arg0: i32, %arg1: memref<64x200xf32, #tpu.memory_space<vmem>>, %arg2: memref<200x160xbf16, #tpu.memory_space<vmem>>, %arg3: memref<1x160xf32, #tpu.memory_space<vmem>>, %arg4: memref<160x80xbf16, #tpu.memory_space<vmem>>, %arg5: memref<1x80xf32, #tpu.memory_space<vmem>>, %arg6: memref<80x20xbf16, #tpu.memory_space<vmem>>, %arg7: memref<1x20xf32, #tpu.memory_space<vmem>>, %arg8: memref<20x2xbf16, #tpu.memory_space<vmem>>, %arg9: memref<1x2xf32, #tpu.memory_space<vmem>>, %arg10: memref<2x128xbf16, #tpu.memory_space<vmem>>, %arg11: memref<1x128xf32, #tpu.memory_space<vmem>>, %arg12: memref<64x128xf32, #tpu.memory_space<vmem>>) attributes {dimension_semantics = [#tpu.dimension_semantics<parallel>], iteration_bounds = array<i64: 1>, scalar_prefetch = 0 : i64, scratch_operands = 0 : i64, tpu.core_type = #tpu.core_type<tc>, window_params = [{transform_indices = @transform_0, window_bounds = array<i64: 64, 200>}, {pipeline_mode = #tpu.pipeline_mode<synchronous>, transform_indices = @transform_1, window_bounds = array<i64: 200, 160>}, {pipeline_mode = #tpu.pipeline_mode<synchronous>, transform_indices = @transform_2, window_bounds = array<i64: 1, 160>}, {pipeline_mode = #tpu.pipeline_mode<synchronous>, transform_indices = @transform_3, window_bounds = array<i64: 160, 80>}, {pipeline_mode = #tpu.pipeline_mode<synchronous>, transform_indices = @transform_4, window_bounds = array<i64: 1, 80>}, {pipeline_mode = #tpu.pipeline_mode<synchronous>, transform_indices = @transform_5, window_bounds = array<i64: 80, 20>}, {pipeline_mode = #tpu.pipeline_mode<synchronous>, transform_indices = @transform_6, window_bounds = array<i64: 1, 20>}, {pipeline_mode = #tpu.pipeline_mode<synchronous>, transform_indices = @transform_7, window_bounds = array<i64: 20, 2>}, {pipeline_mode = #tpu.pipeline_mode<synchronous>, transform_indices = @transform_8, window_bounds = array<i64: 1, 2>}, {pipeline_mode = #tpu.pipeline_mode<synchronous>, transform_indices = @transform_9, window_bounds = array<i64: 2, 128>}, {pipeline_mode = #tpu.pipeline_mode<synchronous>, transform_indices = @transform_10, window_bounds = array<i64: 1, 128>}, {transform_indices = @transform_11, window_bounds = array<i64: 64, 128>}]} {
    %c0 = arith.constant 0 : index
    %c0_0 = arith.constant 0 : index
    %0 = vector.load %arg1[%c0, %c0_0] : memref<64x200xf32, #tpu.memory_space<vmem>>, vector<64x200xf32>
    %1 = arith.truncf %0 : vector<64x200xf32> to vector<64x200xbf16>
    %c0_1 = arith.constant 0 : index
    %c0_2 = arith.constant 0 : index
    %2 = vector.load %arg2[%c0_1, %c0_2] : memref<200x160xbf16, #tpu.memory_space<vmem>>, vector<200x160xbf16>
    %cst = arith.constant dense<0.000000e+00> : vector<64x160xf32>
    %3 = tpu.matmul %1, %2, %cst {dimension_numbers = #tpu.dot_dimension_numbers<[1], [0], [0], [1], [0, 0, 1, 1], [], []>} : vector<64x200xbf16>, vector<200x160xbf16>, vector<64x160xf32> -> vector<64x160xf32>
    %c0_3 = arith.constant 0 : index
    %c0_4 = arith.constant 0 : index
    %4 = vector.load %arg3[%c0_3, %c0_4] : memref<1x160xf32, #tpu.memory_space<vmem>>, vector<1x160xf32>
    %5 = vector.broadcast %4 : vector<1x160xf32> to vector<64x160xf32>
    %6 = arith.addf %3, %5 : vector<64x160xf32>
    %cst_5 = arith.constant 0.000000e+00 : f32
    %7 = vector.broadcast %cst_5 : f32 to vector<64x160xf32>
    %8 = arith.maximumf %6, %7 : vector<64x160xf32>
    %9 = arith.truncf %8 : vector<64x160xf32> to vector<64x160xbf16>
    %c0_6 = arith.constant 0 : index
    %c0_7 = arith.constant 0 : index
    %10 = vector.load %arg4[%c0_6, %c0_7] : memref<160x80xbf16, #tpu.memory_space<vmem>>, vector<160x80xbf16>
    %cst_8 = arith.constant dense<0.000000e+00> : vector<64x80xf32>
    %11 = tpu.matmul %9, %10, %cst_8 {dimension_numbers = #tpu.dot_dimension_numbers<[1], [0], [0], [1], [0, 0, 1, 1], [], []>} : vector<64x160xbf16>, vector<160x80xbf16>, vector<64x80xf32> -> vector<64x80xf32>
    %c0_9 = arith.constant 0 : index
    %c0_10 = arith.constant 0 : index
    %12 = vector.load %arg5[%c0_9, %c0_10] : memref<1x80xf32, #tpu.memory_space<vmem>>, vector<1x80xf32>
    %13 = vector.broadcast %12 : vector<1x80xf32> to vector<64x80xf32>
    %14 = arith.addf %11, %13 : vector<64x80xf32>
    %cst_11 = arith.constant 0.000000e+00 : f32
    %15 = vector.broadcast %cst_11 : f32 to vector<64x80xf32>
    %16 = arith.maximumf %14, %15 : vector<64x80xf32>
    %17 = arith.truncf %16 : vector<64x80xf32> to vector<64x80xbf16>
    %c0_12 = arith.constant 0 : index
    %c0_13 = arith.constant 0 : index
    %18 = vector.load %arg6[%c0_12, %c0_13] : memref<80x20xbf16, #tpu.memory_space<vmem>>, vector<80x20xbf16>
    %cst_14 = arith.constant dense<0.000000e+00> : vector<64x20xf32>
    %19 = tpu.matmul %17, %18, %cst_14 {dimension_numbers = #tpu.dot_dimension_numbers<[1], [0], [0], [1], [0, 0, 1, 1], [], []>} : vector<64x80xbf16>, vector<80x20xbf16>, vector<64x20xf32> -> vector<64x20xf32>
    %c0_15 = arith.constant 0 : index
    %c0_16 = arith.constant 0 : index
    %20 = vector.load %arg7[%c0_15, %c0_16] : memref<1x20xf32, #tpu.memory_space<vmem>>, vector<1x20xf32>
    %21 = vector.broadcast %20 : vector<1x20xf32> to vector<64x20xf32>
    %22 = arith.addf %19, %21 : vector<64x20xf32>
    %cst_17 = arith.constant 0.000000e+00 : f32
    %23 = vector.broadcast %cst_17 : f32 to vector<64x20xf32>
    %24 = arith.maximumf %22, %23 : vector<64x20xf32>
    %25 = arith.truncf %24 : vector<64x20xf32> to vector<64x20xbf16>
    %c0_18 = arith.constant 0 : index
    %c0_19 = arith.constant 0 : index
    %26 = vector.load %arg8[%c0_18, %c0_19] : memref<20x2xbf16, #tpu.memory_space<vmem>>, vector<20x2xbf16>
    %cst_20 = arith.constant dense<0.000000e+00> : vector<64x2xf32>
    %27 = tpu.matmul %25, %26, %cst_20 {dimension_numbers = #tpu.dot_dimension_numbers<[1], [0], [0], [1], [0, 0, 1, 1], [], []>} : vector<64x20xbf16>, vector<20x2xbf16>, vector<64x2xf32> -> vector<64x2xf32>
    %c0_21 = arith.constant 0 : index
    %c0_22 = arith.constant 0 : index
    %28 = vector.load %arg9[%c0_21, %c0_22] : memref<1x2xf32, #tpu.memory_space<vmem>>, vector<1x2xf32>
    %29 = vector.broadcast %28 : vector<1x2xf32> to vector<64x2xf32>
    %30 = arith.addf %27, %29 : vector<64x2xf32>
    %cst_23 = arith.constant 0.000000e+00 : f32
    %31 = vector.broadcast %cst_23 : f32 to vector<64x2xf32>
    %32 = arith.maximumf %30, %31 : vector<64x2xf32>
    %33 = arith.truncf %32 : vector<64x2xf32> to vector<64x2xbf16>
    %c0_24 = arith.constant 0 : index
    %c0_25 = arith.constant 0 : index
    %34 = vector.load %arg10[%c0_24, %c0_25] : memref<2x128xbf16, #tpu.memory_space<vmem>>, vector<2x128xbf16>
    %cst_26 = arith.constant dense<0.000000e+00> : vector<64x128xf32>
    %35 = tpu.matmul %33, %34, %cst_26 {dimension_numbers = #tpu.dot_dimension_numbers<[1], [0], [0], [1], [0, 0, 1, 1], [], []>} : vector<64x2xbf16>, vector<2x128xbf16>, vector<64x128xf32> -> vector<64x128xf32>
    %c0_27 = arith.constant 0 : index
    %c0_28 = arith.constant 0 : index
    %36 = vector.load %arg11[%c0_27, %c0_28] : memref<1x128xf32, #tpu.memory_space<vmem>>, vector<1x128xf32>
    %37 = vector.broadcast %36 : vector<1x128xf32> to vector<64x128xf32>
    %38 = arith.addf %35, %37 : vector<64x128xf32>
    %c0_29 = arith.constant 0 : index
    %c0_30 = arith.constant 0 : index
    %39 = vector.load %arg12[%c0_29, %c0_30] : memref<64x128xf32, #tpu.memory_space<vmem>>, vector<64x128xf32>
    tpu.vector_store %arg12[%c0_29, %c0_30], %38 {strides = array<i32>} : memref<64x128xf32, #tpu.memory_space<vmem>>, vector<64x128xf32>,
    return
  }
  func.func @transform_0(%arg0: i32) -> (i32, i32) {
    %c0_i32 = arith.constant 0 : i32
    %c0_i32_0 = arith.constant 0 : i32
    return %arg0, %c0_i32 : i32, i32
  }
  func.func @transform_1(%arg0: i32) -> (i32, i32) {
    %c0_i32 = arith.constant 0 : i32
    %c0_i32_0 = arith.constant 0 : i32
    %c0_i32_1 = arith.constant 0 : i32
    return %c0_i32, %c0_i32_0 : i32, i32
  }
  func.func @transform_2(%arg0: i32) -> (i32, i32) {
    %c0_i32 = arith.constant 0 : i32
    %c0_i32_0 = arith.constant 0 : i32
    %c0_i32_1 = arith.constant 0 : i32
    return %c0_i32, %c0_i32_0 : i32, i32
  }
  func.func @transform_3(%arg0: i32) -> (i32, i32) {
    %c0_i32 = arith.constant 0 : i32
    %c0_i32_0 = arith.constant 0 : i32
    %c0_i32_1 = arith.constant 0 : i32
    return %c0_i32, %c0_i32_0 : i32, i32
  }
  func.func @transform_4(%arg0: i32) -> (i32, i32) {
    %c0_i32 = arith.constant 0 : i32
    %c0_i32_0 = arith.constant 0 : i32
    %c0_i32_1 = arith.constant 0 : i32
    return %c0_i32, %c0_i32_0 : i32, i32
  }
  func.func @transform_5(%arg0: i32) -> (i32, i32) {
    %c0_i32 = arith.constant 0 : i32
    %c0_i32_0 = arith.constant 0 : i32
    %c0_i32_1 = arith.constant 0 : i32
    return %c0_i32, %c0_i32_0 : i32, i32
  }
  func.func @transform_6(%arg0: i32) -> (i32, i32) {
    %c0_i32 = arith.constant 0 : i32
    %c0_i32_0 = arith.constant 0 : i32
    %c0_i32_1 = arith.constant 0 : i32
    return %c0_i32, %c0_i32_0 : i32, i32
  }
  func.func @transform_7(%arg0: i32) -> (i32, i32) {
    %c0_i32 = arith.constant 0 : i32
    %c0_i32_0 = arith.constant 0 : i32
    %c0_i32_1 = arith.constant 0 : i32
    return %c0_i32, %c0_i32_0 : i32, i32
  }
  func.func @transform_8(%arg0: i32) -> (i32, i32) {
    %c0_i32 = arith.constant 0 : i32
    %c0_i32_0 = arith.constant 0 : i32
    %c0_i32_1 = arith.constant 0 : i32
    return %c0_i32, %c0_i32_0 : i32, i32
  }
  func.func @transform_9(%arg0: i32) -> (i32, i32) {
    %c0_i32 = arith.constant 0 : i32
    %c0_i32_0 = arith.constant 0 : i32
    %c0_i32_1 = arith.constant 0 : i32
    return %c0_i32, %c0_i32_0 : i32, i32
  }
  func.func @transform_10(%arg0: i32) -> (i32, i32) {
    %c0_i32 = arith.constant 0 : i32
    %c0_i32_0 = arith.constant 0 : i32
    %c0_i32_1 = arith.constant 0 : i32
    return %c0_i32, %c0_i32_0 : i32, i32
  }
  func.func @transform_11(%arg0: i32) -> (i32, i32) {
    %c0_i32 = arith.constant 0 : i32
    %c0_i32_0 = arith.constant 0 : i32
    return %arg0, %c0_i32 : i32, i32
  }
}

module attributes {stable_mosaic.version = 11 : i64} {
  func.func @_mlp_kernel(%arg0: i32, %arg1: memref<64x200xf32, #tpu.memory_space<vmem>>, %arg2: memref<200x160xbf16, #tpu.memory_space<vmem>>, %arg3: memref<1x160xf32, #tpu.memory_space<vmem>>, %arg4: memref<160x80xbf16, #tpu.memory_space<vmem>>, %arg5: memref<1x80xf32, #tpu.memory_space<vmem>>, %arg6: memref<80x20xbf16, #tpu.memory_space<vmem>>, %arg7: memref<1x20xf32, #tpu.memory_space<vmem>>, %arg8: memref<20x2xbf16, #tpu.memory_space<vmem>>, %arg9: memref<1x2xf32, #tpu.memory_space<vmem>>, %arg10: memref<2x128xbf16, #tpu.memory_space<vmem>>, %arg11: memref<1x128xf32, #tpu.memory_space<vmem>>, %arg12: memref<64x128xf32, #tpu.memory_space<vmem>>) attributes {dimension_semantics = [#tpu.dimension_semantics<parallel>], iteration_bounds = array<i64: 1>, scalar_prefetch = 0 : i64, scratch_operands = 0 : i64, tpu.core_type = #tpu.core_type<tc>, window_params = [{transform_indices = @transform_0, window_bounds = array<i64: 64, 200>}, {pipeline_mode = #tpu.pipeline_mode<synchronous>, transform_indices = @transform_1, window_bounds = array<i64: 200, 160>}, {pipeline_mode = #tpu.pipeline_mode<synchronous>, transform_indices = @transform_2, window_bounds = array<i64: 1, 160>}, {pipeline_mode = #tpu.pipeline_mode<synchronous>, transform_indices = @transform_3, window_bounds = array<i64: 160, 80>}, {pipeline_mode = #tpu.pipeline_mode<synchronous>, transform_indices = @transform_4, window_bounds = array<i64: 1, 80>}, {pipeline_mode = #tpu.pipeline_mode<synchronous>, transform_indices = @transform_5, window_bounds = array<i64: 80, 20>}, {pipeline_mode = #tpu.pipeline_mode<synchronous>, transform_indices = @transform_6, window_bounds = array<i64: 1, 20>}, {pipeline_mode = #tpu.pipeline_mode<synchronous>, transform_indices = @transform_7, window_bounds = array<i64: 20, 2>}, {pipeline_mode = #tpu.pipeline_mode<synchronous>, transform_indices = @transform_8, window_bounds = array<i64: 1, 2>}, {pipeline_mode = #tpu.pipeline_mode<synchronous>, transform_indices = @transform_9, window_bounds = array<i64: 2, 128>}, {pipeline_mode = #tpu.pipeline_mode<synchronous>, transform_indices = @transform_10, window_bounds = array<i64: 1, 128>}, {transform_indices = @transform_11, window_bounds = array<i64: 64, 128>}]} {
    %c0 = arith.constant 0 : index
    %c0_0 = arith.constant 0 : index
    %0 = vector.load %arg1[%c0, %c0_0] : memref<64x200xf32, #tpu.memory_space<vmem>>, vector<64x200xf32>
    %1 = arith.truncf %0 : vector<64x200xf32> to vector<64x200xbf16>
    %c0_1 = arith.constant 0 : index
    %c0_2 = arith.constant 0 : index
    %2 = vector.load %arg2[%c0_1, %c0_2] : memref<200x160xbf16, #tpu.memory_space<vmem>>, vector<200x160xbf16>
    %cst = arith.constant dense<0.000000e+00> : vector<64x160xf32>
    %3 = tpu.matmul %1, %2, %cst {dimension_numbers = #tpu.dot_dimension_numbers<[1], [0], [0], [1], [0, 0, 1, 1], [], []>} : vector<64x200xbf16>, vector<200x160xbf16>, vector<64x160xf32> -> vector<64x160xf32>
    %c0_3 = arith.constant 0 : index
    %c0_4 = arith.constant 0 : index
    %4 = vector.load %arg3[%c0_3, %c0_4] : memref<1x160xf32, #tpu.memory_space<vmem>>, vector<1x160xf32>
    %5 = vector.broadcast %4 : vector<1x160xf32> to vector<64x160xf32>
    %6 = arith.addf %3, %5 : vector<64x160xf32>
    %cst_5 = arith.constant 0.000000e+00 : f32
    %7 = vector.broadcast %cst_5 : f32 to vector<64x160xf32>
    %8 = arith.maximumf %6, %7 : vector<64x160xf32>
    %9 = arith.truncf %8 : vector<64x160xf32> to vector<64x160xbf16>
    %c0_6 = arith.constant 0 : index
    %c0_7 = arith.constant 0 : index
    %10 = vector.load %arg4[%c0_6, %c0_7] : memref<160x80xbf16, #tpu.memory_space<vmem>>, vector<160x80xbf16>
    %cst_8 = arith.constant dense<0.000000e+00> : vector<64x80xf32>
    %11 = tpu.matmul %9, %10, %cst_8 {dimension_numbers = #tpu.dot_dimension_numbers<[1], [0], [0], [1], [0, 0, 1, 1], [], []>} : vector<64x160xbf16>, vector<160x80xbf16>, vector<64x80xf32> -> vector<64x80xf32>
    %c0_9 = arith.constant 0 : index
    %c0_10 = arith.constant 0 : index
    %12 = vector.load %arg5[%c0_9, %c0_10] : memref<1x80xf32, #tpu.memory_space<vmem>>, vector<1x80xf32>
    %13 = vector.broadcast %12 : vector<1x80xf32> to vector<64x80xf32>
    %14 = arith.addf %11, %13 : vector<64x80xf32>
    %cst_11 = arith.constant 0.000000e+00 : f32
    %15 = vector.broadcast %cst_11 : f32 to vector<64x80xf32>
    %16 = arith.maximumf %14, %15 : vector<64x80xf32>
    %17 = arith.truncf %16 : vector<64x80xf32> to vector<64x80xbf16>
    %c0_12 = arith.constant 0 : index
    %c0_13 = arith.constant 0 : index
    %18 = vector.load %arg6[%c0_12, %c0_13] : memref<80x20xbf16, #tpu.memory_space<vmem>>, vector<80x20xbf16>
    %cst_14 = arith.constant dense<0.000000e+00> : vector<64x20xf32>
    %19 = tpu.matmul %17, %18, %cst_14 {dimension_numbers = #tpu.dot_dimension_numbers<[1], [0], [0], [1], [0, 0, 1, 1], [], []>} : vector<64x80xbf16>, vector<80x20xbf16>, vector<64x20xf32> -> vector<64x20xf32>
    %c0_15 = arith.constant 0 : index
    %c0_16 = arith.constant 0 : index
    %20 = vector.load %arg7[%c0_15, %c0_16] : memref<1x20xf32, #tpu.memory_space<vmem>>, vector<1x20xf32>
    %21 = vector.broadcast %20 : vector<1x20xf32> to vector<64x20xf32>
    %22 = arith.addf %19, %21 : vector<64x20xf32>
    %cst_17 = arith.constant 0.000000e+00 : f32
    %23 = vector.broadcast %cst_17 : f32 to vector<64x20xf32>
    %24 = arith.maximumf %22, %23 : vector<64x20xf32>
    %25 = arith.truncf %24 : vector<64x20xf32> to vector<64x20xbf16>
    %c0_18 = arith.constant 0 : index
    %c0_19 = arith.constant 0 : index
    %26 = vector.load %arg8[%c0_18, %c0_19] : memref<20x2xbf16, #tpu.memory_space<vmem>>, vector<20x2xbf16>
    %cst_20 = arith.constant dense<0.000000e+00> : vector<64x2xf32>
    %27 = tpu.matmul %25, %26, %cst_20 {dimension_numbers = #tpu.dot_dimension_numbers<[1], [0], [0], [1], [0, 0, 1, 1], [], []>} : vector<64x20xbf16>, vector<20x2xbf16>, vector<64x2xf32> -> vector<64x2xf32>
    %c0_21 = arith.constant 0 : index
    %c0_22 = arith.constant 0 : index
    %28 = vector.load %arg9[%c0_21, %c0_22] : memref<1x2xf32, #tpu.memory_space<vmem>>, vector<1x2xf32>
    %29 = vector.broadcast %28 : vector<1x2xf32> to vector<64x2xf32>
    %30 = arith.addf %27, %29 : vector<64x2xf32>
    %cst_23 = arith.constant 0.000000e+00 : f32
    %31 = vector.broadcast %cst_23 : f32 to vector<64x2xf32>
    %32 = arith.maximumf %30, %31 : vector<64x2xf32>
    %33 = arith.truncf %32 : vector<64x2xf32> to vector<64x2xbf16>
    %c0_24 = arith.constant 0 : index
    %c0_25 = arith.constant 0 : index
    %34 = vector.load %arg10[%c0_24, %c0_25] : memref<2x128xbf16, #tpu.memory_space<vmem>>, vector<2x128xbf16>
    %cst_26 = arith.constant dense<0.000000e+00> : vector<64x128xf32>
    %35 = tpu.matmul %33, %34, %cst_26 {dimension_numbers = #tpu.dot_dimension_numbers<[1], [0], [0], [1], [0, 0, 1, 1], [], []>} : vector<64x2xbf16>, vector<2x128xbf16>, vector<64x128xf32> -> vector<64x128xf32>
    %c0_27 = arith.constant 0 : index
    %c0_28 = arith.constant 0 : index
    %36 = vector.load %arg11[%c0_27, %c0_28] : memref<1x128xf32, #tpu.memory_space<vmem>>, vector<1x128xf32>
    %37 = vector.broadcast %36 : vector<1x128xf32> to vector<64x128xf32>
    %38 = arith.addf %35, %37 : vector<64x128xf32>
    %c0_29 = arith.constant 0 : index
    %c0_30 = arith.constant 0 : index
    %39 = vector.load %arg12[%c0_29, %c0_30] : memref<64x128xf32, #tpu.memory_space<vmem>>, vector<64x128xf32>
    tpu.vector_store %arg12[%c0_29, %c0_30], %38 {strides = array<i32>} : memref<64x128xf32, #tpu.memory_space<vmem>>, vector<64x128xf32>,
    return
  }
  func.func @transform_0(%arg0: i32) -> (i32, i32) {
    %c0_i32 = arith.constant 0 : i32
    %c0_i32_0 = arith.constant 0 : i32
    return %arg0, %c0_i32 : i32, i32
  }
  func.func @transform_1(%arg0: i32) -> (i32, i32) {
    %c0_i32 = arith.constant 0 : i32
    %c0_i32_0 = arith.constant 0 : i32
    %c0_i32_1 = arith.constant 0 : i32
    return %c0_i32, %c0_i32_0 : i32, i32
  }
  func.func @transform_2(%arg0: i32) -> (i32, i32) {
    %c0_i32 = arith.constant 0 : i32
    %c0_i32_0 = arith.constant 0 : i32
    %c0_i32_1 = arith.constant 0 : i32
    return %c0_i32, %c0_i32_0 : i32, i32
  }
  func.func @transform_3(%arg0: i32) -> (i32, i32) {
    %c0_i32 = arith.constant 0 : i32
    %c0_i32_0 = arith.constant 0 : i32
    %c0_i32_1 = arith.constant 0 : i32
    return %c0_i32, %c0_i32_0 : i32, i32
  }
  func.func @transform_4(%arg0: i32) -> (i32, i32) {
    %c0_i32 = arith.constant 0 : i32
    %c0_i32_0 = arith.constant 0 : i32
    %c0_i32_1 = arith.constant 0 : i32
    return %c0_i32, %c0_i32_0 : i32, i32
  }
  func.func @transform_5(%arg0: i32) -> (i32, i32) {
    %c0_i32 = arith.constant 0 : i32
    %c0_i32_0 = arith.constant 0 : i32
    %c0_i32_1 = arith.constant 0 : i32
    return %c0_i32, %c0_i32_0 : i32, i32
  }
  func.func @transform_6(%arg0: i32) -> (i32, i32) {
    %c0_i32 = arith.constant 0 : i32
    %c0_i32_0 = arith.constant 0 : i32
    %c0_i32_1 = arith.constant 0 : i32
    return %c0_i32, %c0_i32_0 : i32, i32
  }
  func.func @transform_7(%arg0: i32) -> (i32, i32) {
    %c0_i32 = arith.constant 0 : i32
    %c0_i32_0 = arith.constant 0 : i32
    %c0_i32_1 = arith.constant 0 : i32
    return %c0_i32, %c0_i32_0 : i32, i32
  }
  func.func @transform_8(%arg0: i32) -> (i32, i32) {
    %c0_i32 = arith.constant 0 : i32
    %c0_i32_0 = arith.constant 0 : i32
    %c0_i32_1 = arith.constant 0 : i32
    return %c0_i32, %c0_i32_0 : i32, i32
  }
  func.func @transform_9(%arg0: i32) -> (i32, i32) {
    %c0_i32 = arith.constant 0 : i32
    %c0_i32_0 = arith.constant 0 : i32
    %c0_i32_1 = arith.constant 0 : i32
    return %c0_i32, %c0_i32_0 : i32, i32
  }
  func.func @transform_10(%arg0: i32) -> (i32, i32) {
    %c0_i32 = arith.constant 0 : i32
    %c0_i32_0 = arith.constant 0 : i32
    %c0_i32_1 = arith.constant 0 : i32
    return %c0_i32, %c0_i32_0 : i32, i32
  }
  func.func @transform_11(%arg0: i32) -> (i32, i32) {
    %c0_i32 = arith.constant 0 : i32
    %c0_i32_0 = arith.constant 0 : i32
    return %arg0, %c0_i32 : i32, i32
  }
}

</mosaic_0001>

<llo_original>
// kernel: tpu_custom_call.1
$region0: #{tpu_custom_call.1}
  #allocation0 [shape = 'u32[]', space=smem, size = 0x4, offset = 0x4, fixed_abs, tag = 'smem constant byte address 0x4 - core index']
  #allocation1 [shape = 'u32[72,128]{1,0:T(1,128)}', space=vmem, size = 0x9000, scoped, tag = 'internal scratch']
  %s0 = inlined_call_operand.vmem [shape: f32[64,200], index: 0, kind: input, shape index: {}]
  %s1 = inlined_call_operand.vmem [shape: bf16[200,160], index: 1, kind: input, shape index: {}]
  %s2 = inlined_call_operand.vmem [shape: f32[1,160], index: 2, kind: input, shape index: {}]
  %s3 = inlined_call_operand.vmem [shape: bf16[160,80], index: 3, kind: input, shape index: {}]
  %s4 = inlined_call_operand.vmem [shape: f32[1,80], index: 4, kind: input, shape index: {}]
  %s5 = inlined_call_operand.vmem [shape: bf16[80,20], index: 5, kind: input, shape index: {}]
  %s6 = inlined_call_operand.vmem [shape: f32[1,20], index: 6, kind: input, shape index: {}]
  %s7 = inlined_call_operand.vmem [shape: bf16[20,2], index: 7, kind: input, shape index: {}]
  %s8 = inlined_call_operand.vmem [shape: f32[1,2], index: 8, kind: input, shape index: {}]
  %s9 = inlined_call_operand.vmem [shape: bf16[2,128], index: 9, kind: input, shape index: {}]
  %s10 = inlined_call_operand.vmem [shape: f32[1,128], index: 10, kind: input, shape index: {}]
  %s11 = inlined_call_operand.hbm [shape: f32[64,128], index: 11, kind: output, shape index: {}]
  %s12 = sld [smem:[#allocation0]]
  $region54: #{tpu_custom_call.1} parent=0
    _
  %s14 = ssub.s32 1, %s12
  %s15 = scalar_select 0, %s14, %s12
  $region1: #{tpu_custom_call.1} parent=0
    #allocation2 [shape = 'u8[32768]{0}', space=vmem, size = 0x8000, scoped, tag = 'output window, operand 0, single buffered']
    #allocation3 [shape = 's32[1]{0}', space=sflag, size = 0x4, scoped, tag = 'scoped memory for tpu_custom_call.1']
    %16 = vsyncpa [#allocation3], 0
    // Predicated region
    $region2: #{tpu_custom_call.1} parent=1 // pred_check
      _
    $region3: #{tpu_custom_call.1} parent=1 // pred_check_branch
      %18 = sbr.rel (0) target = $region5
    $region4: #{tpu_custom_call.1} parent=1 // pred_region
      _
    $region5: #{tpu_custom_call.1} parent=1 // pred_fallthru
      _
    // Predicated region
    $region6: #{tpu_custom_call.1} parent=1 // pred_check
      _
    $region7: #{tpu_custom_call.1} parent=1 // pred_check_branch
      %20 = sbr.rel (0) target = $region9
    $region8: #{tpu_custom_call.1} parent=1 // pred_region
      _
    $region9: #{tpu_custom_call.1} parent=1 // pred_fallthru
      _
    // Predicated region
    $region10: #{tpu_custom_call.1} parent=1 // pred_check
      _
    $region11: #{tpu_custom_call.1} parent=1 // pred_check_branch
      %22 = sbr.rel (0) target = $region13
    $region12: #{tpu_custom_call.1} parent=1 // pred_region
      _
    $region13: #{tpu_custom_call.1} parent=1 // pred_fallthru
      _
    // Predicated region
    $region14: #{tpu_custom_call.1} parent=1 // pred_check
      _
    $region15: #{tpu_custom_call.1} parent=1 // pred_check_branch
      %24 = sbr.rel (0) target = $region17
    $region16: #{tpu_custom_call.1} parent=1 // pred_region
      _
    $region17: #{tpu_custom_call.1} parent=1 // pred_fallthru
      _
    // Predicated region
    $region18: #{tpu_custom_call.1} parent=1 // pred_check
      _
    $region19: #{tpu_custom_call.1} parent=1 // pred_check_branch
      %26 = sbr.rel (0) target = $region21
    $region20: #{tpu_custom_call.1} parent=1 // pred_region
      _
    $region21: #{tpu_custom_call.1} parent=1 // pred_fallthru
      _
    // Predicated region
    $region22: #{tpu_custom_call.1} parent=1 // pred_check
      _
    $region23: #{tpu_custom_call.1} parent=1 // pred_check_branch
      %28 = sbr.rel (0) target = $region25
    $region24: #{tpu_custom_call.1} parent=1 // pred_region
      _
    $region25: #{tpu_custom_call.1} parent=1 // pred_fallthru
      _
    // Predicated region
    $region26: #{tpu_custom_call.1} parent=1 // pred_check
      _
    $region27: #{tpu_custom_call.1} parent=1 // pred_check_branch
      %30 = sbr.rel (0) target = $region29
    $region28: #{tpu_custom_call.1} parent=1 // pred_region
      _
    $region29: #{tpu_custom_call.1} parent=1 // pred_fallthru
      _
    // Predicated region
    $region30: #{tpu_custom_call.1} parent=1 // pred_check
      _
    $region31: #{tpu_custom_call.1} parent=1 // pred_check_branch
      %32 = sbr.rel (0) target = $region33
    $region32: #{tpu_custom_call.1} parent=1 // pred_region
      _
    $region33: #{tpu_custom_call.1} parent=1 // pred_fallthru
      _
    // Predicated region
    $region34: #{tpu_custom_call.1} parent=1 // pred_check
      _
    $region35: #{tpu_custom_call.1} parent=1 // pred_check_branch
      %34 = sbr.rel (0) target = $region37
    $region36: #{tpu_custom_call.1} parent=1 // pred_region
      _
    $region37: #{tpu_custom_call.1} parent=1 // pred_fallthru
      _
    // Predicated region
    $region38: #{tpu_custom_call.1} parent=1 // pred_check
      _
    $region39: #{tpu_custom_call.1} parent=1 // pred_check_branch
      %36 = sbr.rel (0) target = $region41
    $region40: #{tpu_custom_call.1} parent=1 // pred_region
      _
    $region41: #{tpu_custom_call.1} parent=1 // pred_fallthru
      _
    // Predicated region
    $region42: #{tpu_custom_call.1} parent=1 // pred_check
      _
    $region43: #{tpu_custom_call.1} parent=1 // pred_check_branch
      %38 = sbr.rel (0) target = $region45
    $region44: #{tpu_custom_call.1} parent=1 // pred_region
      _
    $region45: #{tpu_custom_call.1} parent=1 // pred_fallthru
      _
    %v40 = vld [vmem:[%s0] sm:$0xff]
    %v41 = vld [vmem:[%s0 + $0x8] sm:$0xff]
    %v42 = vld [vmem:[%s0 + $0x10] sm:$0xff]
    %v43 = vld [vmem:[%s0 + $0x18] sm:$0xff]
    %v44 = vld [vmem:[%s0 + $0x20] sm:$0xff]
    %v45 = vld [vmem:[%s0 + $0x28] sm:$0xff]
    %v46 = vld [vmem:[%s0 + $0x30] sm:$0xff]
    %v47 = vld [vmem:[%s0 + $0x38] sm:$0xff]
    %v48 = vld [vmem:[%s0 + $0x40] sm:$0xff]
    %v49 = vld [vmem:[%s0 + $0x48] sm:$0xff]
    %v50 = vld [vmem:[%s0 + $0x50] sm:$0xff]
    %v51 = vld [vmem:[%s0 + $0x58] sm:$0xff]
    %v52 = vld [vmem:[%s0 + $0x60] sm:$0xff]
    %v53 = vld [vmem:[%s0 + $0x68] sm:$0xff]
    %v54 = vld [vmem:[%s0 + $0x70] sm:$0xff]
    %v55 = vld [vmem:[%s0 + $0x78] sm:$0xff]
    %v56 = vpack.c.bf16 %v42, %v40
    %v57 = vpack.c.bf16 %v43, %v41
    %v58 = vpack.c.bf16 %v46, %v44
    %v59 = vpack.c.bf16 %v47, %v45
    %v60 = vpack.c.bf16 %v50, %v48
    %v61 = vpack.c.bf16 %v51, %v49
    %v62 = vpack.c.bf16 %v54, %v52
    %v63 = vpack.c.bf16 %v55, %v53
    %v64 = vld [vmem:[%s1] sm:$0xff]
    %v65 = vld [vmem:[%s1 + $0x8] sm:$0xff]
    %v66 = vld [vmem:[%s1 + $0x10] sm:$0xff]
    %v67 = vld [vmem:[%s1 + $0x18] sm:$0xff]
    %v68 = vld [vmem:[%s1 + $0x20] sm:$0xff]
    %v69 = vld [vmem:[%s1 + $0x28] sm:$0xff]
    %v70 = vld [vmem:[%s1 + $0x30] sm:$0xff]
    %v71 = vld [vmem:[%s1 + $0x38] sm:$0xff]
    %v72 = vld [vmem:[%s1 + $0x40] sm:$0xff]
    %v73 = vld [vmem:[%s1 + $0x48] sm:$0xff]
    %v74 = vld [vmem:[%s1 + $0x50] sm:$0xff]
    %v75 = vld [vmem:[%s1 + $0x58] sm:$0xff]
    %v76 = vld [vmem:[%s1 + $0x60] sm:$0xff]
    %v77 = vld [vmem:[%s1 + $0x68] sm:$0xff]
    %v78 = vld [vmem:[%s1 + $0x70] sm:$0xff]
    %v79 = vld [vmem:[%s1 + $0x78] sm:$0xff]
    %v80 = vld [vmem:[%s1 + $0x80] sm:$0xff]
    %v81 = vld [vmem:[%s1 + $0x88] sm:$0xff]
    %v82 = vld [vmem:[%s1 + $0x90] sm:$0xff]
    %v83 = vld [vmem:[%s1 + $0x98] sm:$0xff]
    %v84 = vld [vmem:[%s1 + $0xa0] sm:$0xff]
    %v85 = vld [vmem:[%s1 + $0xa8] sm:$0xff]
    %v86 = vld [vmem:[%s1 + $0xb0] sm:$0xff]
    %v87 = vld [vmem:[%s1 + $0xb8] sm:$0xff]
    %v88 = vld [vmem:[%s1 + $0xc0] sm:$0xff]
    %v89 = vld [vmem:[%s2] sm:$0x3]
    %v91 = vperm.slane %v89, 0
    %v92 = vperm.slane %v89, 1
    %v120 = vunpack.c.l.b16 %v64
    %v121 = vunpack.c.h.b16 %v64
    %v122 = vunpack.c.l.b16 %v65
    %v123 = vunpack.c.h.b16 %v65
    %v124 = vunpack.c.l.b16 %v66
    %v125 = vunpack.c.h.b16 %v66
    %v126 = vunpack.c.l.b16 %v67
    %v127 = vunpack.c.h.b16 %v67
    %v128 = vunpack.c.l.b16 %v68
    %v129 = vunpack.c.h.b16 %v68
    %v130 = vunpack.c.l.b16 %v69
    %v131 = vunpack.c.h.b16 %v69
    %v132 = vunpack.c.l.b16 %v70
    %v133 = vunpack.c.h.b16 %v70
    %v134 = vunpack.c.l.b16 %v71
    %v135 = vunpack.c.h.b16 %v71
    %v136 = vunpack.c.l.b16 %v72
    %v137 = vunpack.c.h.b16 %v72
    %v138 = vunpack.c.l.b16 %v73
    %v139 = vunpack.c.h.b16 %v73
    %v140 = vunpack.c.l.b16 %v74
    %v141 = vunpack.c.h.b16 %v74
    %v142 = vunpack.c.l.b16 %v75
    %v143 = vunpack.c.h.b16 %v75
    %v144 = vunpack.c.l.b16 %v76
    %v145 = vunpack.c.h.b16 %v76
    %v146 = vunpack.c.l.b16 %v77
    %v147 = vunpack.c.h.b16 %v77
    %v148 = vunpack.c.l.b16 %v78
    %v149 = vunpack.c.h.b16 %v78
    %v150 = vunpack.c.l.b16 %v79
    %v151 = vunpack.c.h.b16 %v79
    %v152 = vunpack.c.l.b16 %v80
    %v153 = vunpack.c.h.b16 %v80
    %v154 = vunpack.c.l.b16 %v81
    %v155 = vunpack.c.h.b16 %v81
    %v156 = vunpack.c.l.b16 %v82
    %v157 = vunpack.c.h.b16 %v82
    %v158 = vunpack.c.l.b16 %v83
    %v159 = vunpack.c.h.b16 %v83
    %v160 = vunpack.c.l.b16 %v84
    %v161 = vunpack.c.h.b16 %v84
    %v162 = vunpack.c.l.b16 %v85
    %v163 = vunpack.c.h.b16 %v85
    %v164 = vunpack.c.l.b16 %v86
    %v165 = vunpack.c.h.b16 %v86
    %v166 = vunpack.c.l.b16 %v87
    %v167 = vunpack.c.h.b16 %v87
    %v168 = vunpack.c.l.b16 %v88
    %v169 = vunpack.c.h.b16 %v88
    %v170 = vpack.c.b16 %v122, %v120
    %v171 = vpack.c.b16 %v123, %v121
    %v172 = vpack.c.b16 %v126, %v124
    %v173 = vpack.c.b16 %v127, %v125
    %v174 = vpack.c.b16 %v130, %v128
    %v175 = vpack.c.b16 %v131, %v129
    %v176 = vpack.c.b16 %v134, %v132
    %v177 = vpack.c.b16 %v135, %v133
    %v178 = vpack.c.b16 %v138, %v136
    %v179 = vpack.c.b16 %v139, %v137
    %v180 = vpack.c.b16 %v142, %v140
    %v181 = vpack.c.b16 %v143, %v141
    %v182 = vpack.c.b16 %v146, %v144
    %v183 = vpack.c.b16 %v147, %v145
    %v184 = vpack.c.b16 %v150, %v148
    %v185 = vpack.c.b16 %v151, %v149
    %v186 = vpack.c.b16 %v154, %v152
    %v187 = vpack.c.b16 %v155, %v153
    %v188 = vpack.c.b16 %v158, %v156
    %v189 = vpack.c.b16 %v159, %v157
    %v190 = vpack.c.b16 %v162, %v160
    %v191 = vpack.c.b16 %v163, %v161
    %v192 = vpack.c.b16 %v166, %v164
    %v193 = vpack.c.b16 %v167, %v165
    %v194 = vpack.c.b16 %v168, %v168
    %v195 = vpack.c.b16 %v169, %v169
    %vm220 = vcmask 588800
    %v222 = vsel %vm220, %v57, 0
    %v225 = vsel %vm220, %v59, 0
    %v228 = vsel %vm220, %v61, 0
    %v231 = vsel %vm220, %v63, 0
    %vm233 = vcmask 1043456
    %v235 = vsel %vm233, %v194, 0
    %v238 = vsel %vm233, %v195, 0
    %240 = vmatpush.bf16.msra.mxu0 %v184
    %241 = vmatpush.bf16.msra.mxu0 %v182
    %242 = vmatpush.bf16.msra.mxu0 %v180
    %243 = vmatpush.bf16.msra.mxu0 %v178
    %244 = vmatpush.bf16.msra.mxu0 %v176
    %245 = vmatpush.bf16.msra.mxu0 %v174
    %246 = vmatpush.bf16.msra.mxu0 %v172
    %247 = vmatpush.bf16.msra.mxu0 %v170
    %248 = vmatmul.bf16.gmra.mxu0 %v56
    %v249 = vpop.f32.mrf.mxu0
    %v250 = vadd.f32 %v91, %v249
    %v251 = vpop.f32.mrf.mxu0
    %v252 = vadd.f32 %v91, %v251
    %253 = vmatmul.bf16.gmra.mxu0 %v58
    %v254 = vpop.f32.mrf.mxu0
    %v255 = vadd.f32 %v91, %v254
    %v256 = vpop.f32.mrf.mxu0
    %v257 = vadd.f32 %v91, %v256
    %258 = vmatmul.bf16.gmra.mxu0 %v60
    %v259 = vpop.f32.mrf.mxu0
    %v260 = vadd.f32 %v91, %v259
    %v261 = vpop.f32.mrf.mxu0
    %v262 = vadd.f32 %v91, %v261
    %263 = vmatmul.bf16.gmra.mxu0 %v62
    %v264 = vpop.f32.mrf.mxu0
    %v265 = vadd.f32 %v91, %v264
    %v266 = vpop.f32.mrf.mxu0
    %v267 = vadd.f32 %v91, %v266
    %268 = vdwg.mxu0
    %269 = vmatpush.bf16.msra.mxu0 0
    %270 = vmatpush.bf16.msra.mxu0 0
    %271 = vmatpush.bf16.msra.mxu0 0
    %272 = vmatpush.bf16.msra.mxu0 %v235
    %273 = vmatpush.bf16.msra.mxu0 %v192
    %274 = vmatpush.bf16.msra.mxu0 %v190
    %275 = vmatpush.bf16.msra.mxu0 %v188
    %276 = vmatpush.bf16.msra.mxu0 %v186
    %277 = vmatmul.bf16.gmra.mxu0 %v222
    %v278 = vpop.f32.mrf.mxu0
    %v279 = vadd.f32 %v250, %v278
    %v280 = vpop.f32.mrf.mxu0
    %v281 = vadd.f32 %v252, %v280
    %282 = vmatmul.bf16.gmra.mxu0 %v225
    %v283 = vpop.f32.mrf.mxu0
    %v284 = vadd.f32 %v255, %v283
    %v285 = vpop.f32.mrf.mxu0
    %v286 = vadd.f32 %v257, %v285
    %287 = vmatmul.bf16.gmra.mxu0 %v228
    %v288 = vpop.f32.mrf.mxu0
    %v289 = vadd.f32 %v260, %v288
    %v290 = vpop.f32.mrf.mxu0
    %v291 = vadd.f32 %v262, %v290
    %292 = vmatmul.bf16.gmra.mxu0 %v231
    %v293 = vpop.f32.mrf.mxu0
    %v294 = vadd.f32 %v265, %v293
    %v295 = vpop.f32.mrf.mxu0
    %v296 = vadd.f32 %v267, %v295
    %297 = vdwg.mxu0
    %298 = vmatpush.bf16.msra.mxu0 %v185
    %299 = vmatpush.bf16.msra.mxu0 %v183
    %300 = vmatpush.bf16.msra.mxu0 %v181
    %301 = vmatpush.bf16.msra.mxu0 %v179
    %302 = vmatpush.bf16.msra.mxu0 %v177
    %303 = vmatpush.bf16.msra.mxu0 %v175
    %304 = vmatpush.bf16.msra.mxu0 %v173
    %305 = vmatpush.bf16.msra.mxu0 %v171
    %306 = vmatmul.bf16.gmra.mxu0 %v56
    %v307 = vpop.f32.mrf.mxu0
    %v308 = vadd.f32 %v92, %v307
    %v309 = vpop.f32.mrf.mxu0
    %v310 = vadd.f32 %v92, %v309
    %311 = vmatmul.bf16.gmra.mxu0 %v58
    %v312 = vpop.f32.mrf.mxu0
    %v313 = vadd.f32 %v92, %v312
    %v314 = vpop.f32.mrf.mxu0
    %v315 = vadd.f32 %v92, %v314
    %316 = vmatmul.bf16.gmra.mxu0 %v60
    %v317 = vpop.f32.mrf.mxu0
    %v318 = vadd.f32 %v92, %v317
    %v319 = vpop.f32.mrf.mxu0
    %v320 = vadd.f32 %v92, %v319
    %321 = vmatmul.bf16.gmra.mxu0 %v62
    %v322 = vpop.f32.mrf.mxu0
    %v323 = vadd.f32 %v92, %v322
    %v324 = vpop.f32.mrf.mxu0
    %v325 = vadd.f32 %v92, %v324
    %326 = vdwg.mxu0
    %327 = vmatpush.bf16.msra.mxu0 0
    %328 = vmatpush.bf16.msra.mxu0 0
    %329 = vmatpush.bf16.msra.mxu0 0
    %330 = vmatpush.bf16.msra.mxu0 %v238
    %331 = vmatpush.bf16.msra.mxu0 %v193
    %332 = vmatpush.bf16.msra.mxu0 %v191
    %333 = vmatpush.bf16.msra.mxu0 %v189
    %334 = vmatpush.bf16.msra.mxu0 %v187
    %335 = vmatmul.bf16.gmra.mxu0 %v222
    %v336 = vpop.f32.mrf.mxu0
    %v337 = vadd.f32 %v308, %v336
    %v338 = vpop.f32.mrf.mxu0
    %v339 = vadd.f32 %v310, %v338
    %340 = vmatmul.bf16.gmra.mxu0 %v225
    %v341 = vpop.f32.mrf.mxu0
    %v342 = vadd.f32 %v313, %v341
    %v343 = vpop.f32.mrf.mxu0
    %v344 = vadd.f32 %v315, %v343
    %345 = vmatmul.bf16.gmra.mxu0 %v228
    %v346 = vpop.f32.mrf.mxu0
    %v347 = vadd.f32 %v318, %v346
    %v348 = vpop.f32.mrf.mxu0
    %v349 = vadd.f32 %v320, %v348
    %350 = vmatmul.bf16.gmra.mxu0 %v231
    %v351 = vpop.f32.mrf.mxu0
    %v352 = vadd.f32 %v323, %v351
    %v353 = vpop.f32.mrf.mxu0
    %v354 = vadd.f32 %v325, %v353
    %355 = vdwg.mxu0
    %v356 = vmax.f32 %v279, 0.0
    %v357 = vmax.f32 %v337, 0.0
    %v358 = vmax.f32 %v281, 0.0
    %v359 = vmax.f32 %v339, 0.0
    %v360 = vmax.f32 %v284, 0.0
    %v361 = vmax.f32 %v342, 0.0
    %v362 = vmax.f32 %v286, 0.0
    %v363 = vmax.f32 %v344, 0.0
    %v364 = vmax.f32 %v289, 0.0
    %v365 = vmax.f32 %v347, 0.0
    %v366 = vmax.f32 %v291, 0.0
    %v367 = vmax.f32 %v349, 0.0
    %v368 = vmax.f32 %v294, 0.0
    %v369 = vmax.f32 %v352, 0.0
    %v370 = vmax.f32 %v296, 0.0
    %v371 = vmax.f32 %v354, 0.0
    %v372 = vpack.c.bf16 %v358, %v356
    %v373 = vpack.c.bf16 %v359, %v357
    %v374 = vpack.c.bf16 %v362, %v360
    %v375 = vpack.c.bf16 %v363, %v361
    %v376 = vpack.c.bf16 %v366, %v364
    %v377 = vpack.c.bf16 %v367, %v365
    %v378 = vpack.c.bf16 %v370, %v368
    %v379 = vpack.c.bf16 %v371, %v369
    %v380 = vld [vmem:[%s3] sm:$0xf]
    %v381 = vld [vmem:[%s3 + $0x4] sm:$0xf]
    %v382 = vld [vmem:[%s3 + $0x8] sm:$0xf]
    %v383 = vld [vmem:[%s3 + $0xc] sm:$0xf]
    %v384 = vld [vmem:[%s3 + $0x10] sm:$0xf]
    %v385 = vld [vmem:[%s3 + $0x14] sm:$0xf]
    %v386 = vld [vmem:[%s3 + $0x18] sm:$0xf]
    %v387 = vld [vmem:[%s3 + $0x1c] sm:$0xf]
    %v388 = vld [vmem:[%s3 + $0x20] sm:$0xf]
    %v389 = vld [vmem:[%s3 + $0x24] sm:$0xf]
    %v390 = vld [vmem:[%s3 + $0x28] sm:$0xf]
    %v391 = vld [vmem:[%s3 + $0x2c] sm:$0xf]
    %v392 = vld [vmem:[%s3 + $0x30] sm:$0xf]
    %v393 = vld [vmem:[%s3 + $0x34] sm:$0xf]
    %v394 = vld [vmem:[%s3 + $0x38] sm:$0xf]
    %v395 = vld [vmem:[%s3 + $0x3c] sm:$0xf]
    %v396 = vld [vmem:[%s3 + $0x40] sm:$0xf]
    %v397 = vld [vmem:[%s3 + $0x44] sm:$0xf]
    %v398 = vld [vmem:[%s3 + $0x48] sm:$0xf]
    %v399 = vld [vmem:[%s3 + $0x4c] sm:$0xf]
    %v400 = vld [vmem:[%s4] sm:$0x1]
    %v402 = vperm.slane %v400, 0
    %v424 = vunpack.c.l.b16 %v380
    %v425 = vunpack.c.l.b16 %v381
    %v426 = vunpack.c.l.b16 %v382
    %v427 = vunpack.c.l.b16 %v383
    %v428 = vunpack.c.l.b16 %v384
    %v429 = vunpack.c.l.b16 %v385
    %v430 = vunpack.c.l.b16 %v386
    %v431 = vunpack.c.l.b16 %v387
    %v432 = vunpack.c.l.b16 %v388
    %v433 = vunpack.c.l.b16 %v389
    %v434 = vunpack.c.l.b16 %v390
    %v435 = vunpack.c.l.b16 %v391
    %v436 = vunpack.c.l.b16 %v392
    %v437 = vunpack.c.l.b16 %v393
    %v438 = vunpack.c.l.b16 %v394
    %v439 = vunpack.c.l.b16 %v395
    %v440 = vunpack.c.l.b16 %v396
    %v441 = vunpack.c.l.b16 %v397
    %v442 = vunpack.c.l.b16 %v398
    %v443 = vunpack.c.l.b16 %v399
    %v444 = vpack.c.b16 %v425, %v424
    %v445 = vpack.c.b16 %v427, %v426
    %v446 = vpack.c.b16 %v429, %v428
    %v447 = vpack.c.b16 %v431, %v430
    %v448 = vpack.c.b16 %v433, %v432
    %v449 = vpack.c.b16 %v435, %v434
    %v450 = vpack.c.b16 %v437, %v436
    %v451 = vpack.c.b16 %v439, %v438
    %v452 = vpack.c.b16 %v441, %v440
    %v453 = vpack.c.b16 %v443, %v442
    %vm464 = vcmask 261120
    %v466 = vsel %vm464, %v373, 0
    %v469 = vsel %vm464, %v375, 0
    %v472 = vsel %vm464, %v377, 0
    %v475 = vsel %vm464, %v379, 0
    %477 = vmatpush.bf16.msra.mxu0 %v451
    %478 = vmatpush.bf16.msra.mxu0 %v450
    %479 = vmatpush.bf16.msra.mxu0 %v449
    %480 = vmatpush.bf16.msra.mxu0 %v448
    %481 = vmatpush.bf16.msra.mxu0 %v447
    %482 = vmatpush.bf16.msra.mxu0 %v446
    %483 = vmatpush.bf16.msra.mxu0 %v445
    %484 = vmatpush.bf16.msra.mxu0 %v444
    %485 = vmatmul.bf16.gmra.mxu0 %v372
    %v486 = vpop.f32.mrf.mxu0
    %v487 = vadd.f32 %v402, %v486
    %v488 = vpop.f32.mrf.mxu0
    %v489 = vadd.f32 %v402, %v488
    %490 = vmatmul.bf16.gmra.mxu0 %v374
    %v491 = vpop.f32.mrf.mxu0
    %v492 = vadd.f32 %v402, %v491
    %v493 = vpop.f32.mrf.mxu0
    %v494 = vadd.f32 %v402, %v493
    %495 = vmatmul.bf16.gmra.mxu0 %v376
    %v496 = vpop.f32.mrf.mxu0
    %v497 = vadd.f32 %v402, %v496
    %v498 = vpop.f32.mrf.mxu0
    %v499 = vadd.f32 %v402, %v498
    %500 = vmatmul.bf16.gmra.mxu0 %v378
    %v501 = vpop.f32.mrf.mxu0
    %v502 = vadd.f32 %v402, %v501
    %v503 = vpop.f32.mrf.mxu0
    %v504 = vadd.f32 %v402, %v503
    %505 = vdwg.mxu0
    %506 = vmatpush.bf16.msra.mxu0 0
    %507 = vmatpush.bf16.msra.mxu0 0
    %508 = vmatpush.bf16.msra.mxu0 0
    %509 = vmatpush.bf16.msra.mxu0 0
    %510 = vmatpush.bf16.msra.mxu0 0
    %511 = vmatpush.bf16.msra.mxu0 0
    %512 = vmatpush.bf16.msra.mxu0 %v453
    %513 = vmatpush.bf16.msra.mxu0 %v452
    %514 = vmatmul.bf16.gmra.mxu0 %v466
    %v515 = vpop.f32.mrf.mxu0
    %v516 = vadd.f32 %v487, %v515
    %v517 = vpop.f32.mrf.mxu0
    %v518 = vadd.f32 %v489, %v517
    %519 = vmatmul.bf16.gmra.mxu0 %v469
    %v520 = vpop.f32.mrf.mxu0
    %v521 = vadd.f32 %v492, %v520
    %v522 = vpop.f32.mrf.mxu0
    %v523 = vadd.f32 %v494, %v522
    %524 = vmatmul.bf16.gmra.mxu0 %v472
    %v525 = vpop.f32.mrf.mxu0
    %v526 = vadd.f32 %v497, %v525
    %v527 = vpop.f32.mrf.mxu0
    %v528 = vadd.f32 %v499, %v527
    %529 = vmatmul.bf16.gmra.mxu0 %v475
    %v530 = vpop.f32.mrf.mxu0
    %v531 = vadd.f32 %v502, %v530
    %v532 = vpop.f32.mrf.mxu0
    %v533 = vadd.f32 %v504, %v532
    %534 = vdwg.mxu0
    %v535 = vmax.f32 %v516, 0.0
    %v536 = vmax.f32 %v518, 0.0
    %v537 = vmax.f32 %v521, 0.0
    %v538 = vmax.f32 %v523, 0.0
    %v539 = vmax.f32 %v526, 0.0
    %v540 = vmax.f32 %v528, 0.0
    %v541 = vmax.f32 %v531, 0.0
    %v542 = vmax.f32 %v533, 0.0
    %v543 = vpack.c.bf16 %v536, %v535
    %v544 = vpack.c.bf16 %v538, %v537
    %v545 = vpack.c.bf16 %v540, %v539
    %v546 = vpack.c.bf16 %v542, %v541
    %v547 = vld [vmem:[%s5] sm:$0xf]
    %v548 = vld [vmem:[%s5 + $0x4] sm:$0xf]
    %v549 = vld [vmem:[%s5 + $0x8] sm:$0xf]
    %v550 = vld [vmem:[%s5 + $0xc] sm:$0xf]
    %v551 = vld [vmem:[%s5 + $0x10] sm:$0xf]
    %v552 = vld [vmem:[%s5 + $0x14] sm:$0xf]
    %v553 = vld [vmem:[%s5 + $0x18] sm:$0xf]
    %v554 = vld [vmem:[%s5 + $0x1c] sm:$0xf]
    %v555 = vld [vmem:[%s5 + $0x20] sm:$0xf]
    %v556 = vld [vmem:[%s5 + $0x24] sm:$0xf]
    %v557 = vld [vmem:[%s6] sm:$0x1]
    %v559 = vperm.slane %v557, 0
    %v571 = vunpack.c.l.b16 %v547
    %v572 = vunpack.c.l.b16 %v548
    %v573 = vunpack.c.l.b16 %v549
    %v574 = vunpack.c.l.b16 %v550
    %v575 = vunpack.c.l.b16 %v551
    %v576 = vunpack.c.l.b16 %v552
    %v577 = vunpack.c.l.b16 %v553
    %v578 = vunpack.c.l.b16 %v554
    %v579 = vunpack.c.l.b16 %v555
    %v580 = vunpack.c.l.b16 %v556
    %v581 = vpack.c.b16 %v572, %v571
    %v582 = vpack.c.b16 %v574, %v573
    %v583 = vpack.c.b16 %v576, %v575
    %v584 = vpack.c.b16 %v578, %v577
    %v585 = vpack.c.b16 %v580, %v579
    %vm591 = vcmask 654336
    %v593 = vsel %vm591, %v543, 0
    %v596 = vsel %vm591, %v544, 0
    %v599 = vsel %vm591, %v545, 0
    %v602 = vsel %vm591, %v546, 0
    %604 = vmatpush.bf16.msra.mxu0 0
    %605 = vmatpush.bf16.msra.mxu0 0
    %606 = vmatpush.bf16.msra.mxu0 0
    %607 = vmatpush.bf16.msra.mxu0 %v585
    %608 = vmatpush.bf16.msra.mxu0 %v584
    %609 = vmatpush.bf16.msra.mxu0 %v583
    %610 = vmatpush.bf16.msra.mxu0 %v582
    %611 = vmatpush.bf16.msra.mxu0 %v581
    %612 = vmatmul.bf16.gmra.mxu0 %v593
    %v613 = vpop.f32.mrf.mxu0
    %v614 = vadd.f32 %v559, %v613
    %v615 = vpop.f32.mrf.mxu0
    %v616 = vadd.f32 %v559, %v615
    %617 = vmatmul.bf16.gmra.mxu0 %v596
    %v618 = vpop.f32.mrf.mxu0
    %v619 = vadd.f32 %v559, %v618
    %v620 = vpop.f32.mrf.mxu0
    %v621 = vadd.f32 %v559, %v620
    %622 = vmatmul.bf16.gmra.mxu0 %v599
    %v623 = vpop.f32.mrf.mxu0
    %v624 = vadd.f32 %v559, %v623
    %v625 = vpop.f32.mrf.mxu0
    %v626 = vadd.f32 %v559, %v625
    %627 = vmatmul.bf16.gmra.mxu0 %v602
    %v628 = vpop.f32.mrf.mxu0
    %v629 = vadd.f32 %v559, %v628
    %v630 = vpop.f32.mrf.mxu0
    %v631 = vadd.f32 %v559, %v630
    %632 = vdwg.mxu0
    %v633 = vmax.f32 %v614, 0.0
    %v634 = vmax.f32 %v616, 0.0
    %v635 = vmax.f32 %v619, 0.0
    %v636 = vmax.f32 %v621, 0.0
    %v637 = vmax.f32 %v624, 0.0
    %v638 = vmax.f32 %v626, 0.0
    %v639 = vmax.f32 %v629, 0.0
    %v640 = vmax.f32 %v631, 0.0
    %v641 = vpack.c.bf16 %v634, %v633
    %v642 = vpack.c.bf16 %v636, %v635
    %v643 = vpack.c.bf16 %v638, %v637
    %v644 = vpack.c.bf16 %v640, %v639
    %v645 = vld [vmem:[%s7] sm:$0xf]
    %v646 = vld [vmem:[%s7 + $0x4] sm:$0xf]
    %v647 = vld [vmem:[%s7 + $0x8] sm:$0x3]
    %v648 = vld [vmem:[%s8] sm:$0x1]
    %v650 = vperm.slane %v648, 0
    %v655 = vunpack.c.l.b16 %v645
    %v656 = vunpack.c.l.b16 %v646
    %v657 = vunpack.c.l.b16 %v647
    %v658 = vpack.c.b16 %v656, %v655
    %v659 = vpack.c.b16 %v657, %v657
    %vm661 = vcmask 162816
    %v663 = vsel %vm661, %v641, 0
    %v666 = vsel %vm661, %v642, 0
    %v669 = vsel %vm661, %v643, 0
    %v672 = vsel %vm661, %v644, 0
    %vm674 = vcmask 1041408
    %v676 = vsel %vm674, %v659, 0
    %678 = vmatpush.bf16.msra.mxu0 0
    %679 = vmatpush.bf16.msra.mxu0 0
    %680 = vmatpush.bf16.msra.mxu0 0
    %681 = vmatpush.bf16.msra.mxu0 0
    %682 = vmatpush.bf16.msra.mxu0 0
    %683 = vmatpush.bf16.msra.mxu0 0
    %684 = vmatpush.bf16.msra.mxu0 %v676
    %685 = vmatpush.bf16.msra.mxu0 %v658
    %686 = vmatmul.bf16.gmra.mxu0 %v663
    %v687 = vpop.f32.mrf.mxu0
    %v688 = vadd.f32 %v650, %v687
    %v689 = vpop.f32.mrf.mxu0
    %v690 = vadd.f32 %v650, %v689
    %691 = vmatmul.bf16.gmra.mxu0 %v666
    %v692 = vpop.f32.mrf.mxu0
    %v693 = vadd.f32 %v650, %v692
    %v694 = vpop.f32.mrf.mxu0
    %v695 = vadd.f32 %v650, %v694
    %696 = vmatmul.bf16.gmra.mxu0 %v669
    %v697 = vpop.f32.mrf.mxu0
    %v698 = vadd.f32 %v650, %v697
    %v699 = vpop.f32.mrf.mxu0
    %v700 = vadd.f32 %v650, %v699
    %701 = vmatmul.bf16.gmra.mxu0 %v672
    %v702 = vpop.f32.mrf.mxu0
    %v703 = vadd.f32 %v650, %v702
    %v704 = vpop.f32.mrf.mxu0
    %v705 = vadd.f32 %v650, %v704
    %706 = vdwg.mxu0
    %v707 = vmax.f32 %v688, 0.0
    %v708 = vmax.f32 %v690, 0.0
    %v709 = vmax.f32 %v693, 0.0
    %v710 = vmax.f32 %v695, 0.0
    %v711 = vmax.f32 %v698, 0.0
    %v712 = vmax.f32 %v700, 0.0
    %v713 = vmax.f32 %v703, 0.0
    %v714 = vmax.f32 %v705, 0.0
    %v715 = vpack.c.bf16 %v708, %v707
    %v716 = vpack.c.bf16 %v710, %v709
    %v717 = vpack.c.bf16 %v712, %v711
    %v718 = vpack.c.bf16 %v714, %v713
    %v719 = vld [vmem:[%s9] sm:$0x1]
    %v720 = vld [vmem:[%s10] sm:$0x1]
    %v722 = vperm.slane %v720, 0
    %vm724 = vcmask 15360
    %v726 = vsel %vm724, %v715, 0
    %v729 = vsel %vm724, %v716, 0
    %v732 = vsel %vm724, %v717, 0
    %v735 = vsel %vm724, %v718, 0
    %vm737 = vcmask 1040384
    %v739 = vsel %vm737, %v719, 0
    %741 = vmatpush.bf16.msra.mxu0 0
    %742 = vmatpush.bf16.msra.mxu0 0
    %743 = vmatpush.bf16.msra.mxu0 0
    %744 = vmatpush.bf16.msra.mxu0 0
    %745 = vmatpush.bf16.msra.mxu0 0
    %746 = vmatpush.bf16.msra.mxu0 0
    %747 = vmatpush.bf16.msra.mxu0 0
    %748 = vmatpush.bf16.msra.mxu0 %v739
    %749 = vmatmul.bf16.gmra.mxu0 %v726
    %v750 = vpop.f32.mrf.mxu0
    %v751 = vadd.f32 %v722, %v750
    %v752 = vpop.f32.mrf.mxu0
    %v753 = vadd.f32 %v722, %v752
    %754 = vmatmul.bf16.gmra.mxu0 %v729
    %v755 = vpop.f32.mrf.mxu0
    %v756 = vadd.f32 %v722, %v755
    %v757 = vpop.f32.mrf.mxu0
    %v758 = vadd.f32 %v722, %v757
    %759 = vmatmul.bf16.gmra.mxu0 %v732
    %v760 = vpop.f32.mrf.mxu0
    %v761 = vadd.f32 %v722, %v760
    %v762 = vpop.f32.mrf.mxu0
    %v763 = vadd.f32 %v722, %v762
    %764 = vmatmul.bf16.gmra.mxu0 %v735
    %v765 = vpop.f32.mrf.mxu0
    %v766 = vadd.f32 %v722, %v765
    %v767 = vpop.f32.mrf.mxu0
    %v768 = vadd.f32 %v722, %v767
    %769 = vdwg.mxu0
    %770 = vst [vmem:[#allocation2] sm:$0xff] %v751
    %771 = vst [vmem:[#allocation2 + $0x8] sm:$0xff] %v753
    %772 = vst [vmem:[#allocation2 + $0x10] sm:$0xff] %v756
    %773 = vst [vmem:[#allocation2 + $0x18] sm:$0xff] %v758
    %774 = vst [vmem:[#allocation2 + $0x20] sm:$0xff] %v761
    %775 = vst [vmem:[#allocation2 + $0x28] sm:$0xff] %v763
    %776 = vst [vmem:[#allocation2 + $0x30] sm:$0xff] %v766
    %777 = vst [vmem:[#allocation2 + $0x38] sm:$0xff] %v768
    // Predicated region
    $region46: #{tpu_custom_call.1} parent=1 // pred_check
      _
    $region47: #{tpu_custom_call.1} parent=1 // pred_check_branch
      %779 = sbr.rel (0) target = $region49
    $region48: #{tpu_custom_call.1} parent=1 // pred_region
      %781 = vsyncadd [#allocation3], 0
      %s782 = sshll.u32 [#allocation2], 4
      %s783 = int_to_ptr.vmem [resolvable:$true] %s782
      %s784 = sshll.u32 %s11, 4
      %s785 = int_to_ptr.hbm [resolvable:$true] %s784
      %790 = dma.vmem_to_hbm [thread:$0]  %s783, 1024, %s785, [#allocation3], 128, 128, 8
    $region49: #{tpu_custom_call.1} parent=1 // pred_fallthru
      _
    // Predicated region
    $region50: #{tpu_custom_call.1} parent=1 // pred_check
      _
    $region51: #{tpu_custom_call.1} parent=1 // pred_check_branch
      %792 = sbr.rel (0) target = $region53
    $region52: #{tpu_custom_call.1} parent=1 // pred_region
      %794 = dma.done [#allocation3], 1024
    $region53: #{tpu_custom_call.1} parent=1 // pred_fallthru
      _
    %795 = vsyncpa [#allocation3], 1

// kernel: tpu_custom_call.1
$region0: #{tpu_custom_call.1}
  #allocation0 [shape = 'u32[]', space=smem, size = 0x4, offset = 0x4, fixed_abs, tag = 'smem constant byte address 0x4 - core index']
  #allocation1 [shape = 'u32[72,128]{1,0:T(1,128)}', space=vmem, size = 0x9000, scoped, tag = 'internal scratch']
  %s0 = inlined_call_operand.vmem [shape: f32[64,200], index: 0, kind: input, shape index: {}]
  %s1 = inlined_call_operand.vmem [shape: bf16[200,160], index: 1, kind: input, shape index: {}]
  %s2 = inlined_call_operand.vmem [shape: f32[1,160], index: 2, kind: input, shape index: {}]
  %s3 = inlined_call_operand.vmem [shape: bf16[160,80], index: 3, kind: input, shape index: {}]
  %s4 = inlined_call_operand.vmem [shape: f32[1,80], index: 4, kind: input, shape index: {}]
  %s5 = inlined_call_operand.vmem [shape: bf16[80,20], index: 5, kind: input, shape index: {}]
  %s6 = inlined_call_operand.vmem [shape: f32[1,20], index: 6, kind: input, shape index: {}]
  %s7 = inlined_call_operand.vmem [shape: bf16[20,2], index: 7, kind: input, shape index: {}]
  %s8 = inlined_call_operand.vmem [shape: f32[1,2], index: 8, kind: input, shape index: {}]
  %s9 = inlined_call_operand.vmem [shape: bf16[2,128], index: 9, kind: input, shape index: {}]
  %s10 = inlined_call_operand.vmem [shape: f32[1,128], index: 10, kind: input, shape index: {}]
  %s11 = inlined_call_operand.hbm [shape: f32[64,128], index: 11, kind: output, shape index: {}]
  %s12 = sld [smem:[#allocation0]]
  $region54: #{tpu_custom_call.1} parent=0
    _
  %s14 = ssub.s32 1, %s12
  %s15 = scalar_select 0, %s14, %s12
  $region1: #{tpu_custom_call.1} parent=0
    #allocation2 [shape = 'u8[32768]{0}', space=vmem, size = 0x8000, scoped, tag = 'output window, operand 0, single buffered']
    #allocation3 [shape = 's32[1]{0}', space=sflag, size = 0x4, scoped, tag = 'scoped memory for tpu_custom_call.1']
    %16 = vsyncpa [#allocation3], 0
    // Predicated region
    $region2: #{tpu_custom_call.1} parent=1 // pred_check
      _
    $region3: #{tpu_custom_call.1} parent=1 // pred_check_branch
      %18 = sbr.rel (0) target = $region5
    $region4: #{tpu_custom_call.1} parent=1 // pred_region
      _
    $region5: #{tpu_custom_call.1} parent=1 // pred_fallthru
      _
    // Predicated region
    $region6: #{tpu_custom_call.1} parent=1 // pred_check
      _
    $region7: #{tpu_custom_call.1} parent=1 // pred_check_branch
      %20 = sbr.rel (0) target = $region9
    $region8: #{tpu_custom_call.1} parent=1 // pred_region
      _
    $region9: #{tpu_custom_call.1} parent=1 // pred_fallthru
      _
    // Predicated region
    $region10: #{tpu_custom_call.1} parent=1 // pred_check
      _
    $region11: #{tpu_custom_call.1} parent=1 // pred_check_branch
      %22 = sbr.rel (0) target = $region13
    $region12: #{tpu_custom_call.1} parent=1 // pred_region
      _
    $region13: #{tpu_custom_call.1} parent=1 // pred_fallthru
      _
    // Predicated region
    $region14: #{tpu_custom_call.1} parent=1 // pred_check
      _
    $region15: #{tpu_custom_call.1} parent=1 // pred_check_branch
      %24 = sbr.rel (0) target = $region17
    $region16: #{tpu_custom_call.1} parent=1 // pred_region
      _
    $region17: #{tpu_custom_call.1} parent=1 // pred_fallthru
      _
    // Predicated region
    $region18: #{tpu_custom_call.1} parent=1 // pred_check
      _
    $region19: #{tpu_custom_call.1} parent=1 // pred_check_branch
      %26 = sbr.rel (0) target = $region21
    $region20: #{tpu_custom_call.1} parent=1 // pred_region
      _
    $region21: #{tpu_custom_call.1} parent=1 // pred_fallthru
      _
    // Predicated region
    $region22: #{tpu_custom_call.1} parent=1 // pred_check
      _
    $region23: #{tpu_custom_call.1} parent=1 // pred_check_branch
      %28 = sbr.rel (0) target = $region25
    $region24: #{tpu_custom_call.1} parent=1 // pred_region
      _
    $region25: #{tpu_custom_call.1} parent=1 // pred_fallthru
      _
    // Predicated region
    $region26: #{tpu_custom_call.1} parent=1 // pred_check
      _
    $region27: #{tpu_custom_call.1} parent=1 // pred_check_branch
      %30 = sbr.rel (0) target = $region29
    $region28: #{tpu_custom_call.1} parent=1 // pred_region
      _
    $region29: #{tpu_custom_call.1} parent=1 // pred_fallthru
      _
    // Predicated region
    $region30: #{tpu_custom_call.1} parent=1 // pred_check
      _
    $region31: #{tpu_custom_call.1} parent=1 // pred_check_branch
      %32 = sbr.rel (0) target = $region33
    $region32: #{tpu_custom_call.1} parent=1 // pred_region
      _
    $region33: #{tpu_custom_call.1} parent=1 // pred_fallthru
      _
    // Predicated region
    $region34: #{tpu_custom_call.1} parent=1 // pred_check
      _
    $region35: #{tpu_custom_call.1} parent=1 // pred_check_branch
      %34 = sbr.rel (0) target = $region37
    $region36: #{tpu_custom_call.1} parent=1 // pred_region
      _
    $region37: #{tpu_custom_call.1} parent=1 // pred_fallthru
      _
    // Predicated region
    $region38: #{tpu_custom_call.1} parent=1 // pred_check
      _
    $region39: #{tpu_custom_call.1} parent=1 // pred_check_branch
      %36 = sbr.rel (0) target = $region41
    $region40: #{tpu_custom_call.1} parent=1 // pred_region
      _
    $region41: #{tpu_custom_call.1} parent=1 // pred_fallthru
      _
    // Predicated region
    $region42: #{tpu_custom_call.1} parent=1 // pred_check
      _
    $region43: #{tpu_custom_call.1} parent=1 // pred_check_branch
      %38 = sbr.rel (0) target = $region45
    $region44: #{tpu_custom_call.1} parent=1 // pred_region
      _
    $region45: #{tpu_custom_call.1} parent=1 // pred_fallthru
      _
    %v40 = vld [vmem:[%s0] sm:$0xff]
    %v41 = vld [vmem:[%s0 + $0x8] sm:$0xff]
    %v42 = vld [vmem:[%s0 + $0x10] sm:$0xff]
    %v43 = vld [vmem:[%s0 + $0x18] sm:$0xff]
    %v44 = vld [vmem:[%s0 + $0x20] sm:$0xff]
    %v45 = vld [vmem:[%s0 + $0x28] sm:$0xff]
    %v46 = vld [vmem:[%s0 + $0x30] sm:$0xff]
    %v47 = vld [vmem:[%s0 + $0x38] sm:$0xff]
    %v48 = vld [vmem:[%s0 + $0x40] sm:$0xff]
    %v49 = vld [vmem:[%s0 + $0x48] sm:$0xff]
    %v50 = vld [vmem:[%s0 + $0x50] sm:$0xff]
    %v51 = vld [vmem:[%s0 + $0x58] sm:$0xff]
    %v52 = vld [vmem:[%s0 + $0x60] sm:$0xff]
    %v53 = vld [vmem:[%s0 + $0x68] sm:$0xff]
    %v54 = vld [vmem:[%s0 + $0x70] sm:$0xff]
    %v55 = vld [vmem:[%s0 + $0x78] sm:$0xff]
    %v56 = vpack.c.bf16 %v42, %v40
    %v57 = vpack.c.bf16 %v43, %v41
    %v58 = vpack.c.bf16 %v46, %v44
    %v59 = vpack.c.bf16 %v47, %v45
    %v60 = vpack.c.bf16 %v50, %v48
    %v61 = vpack.c.bf16 %v51, %v49
    %v62 = vpack.c.bf16 %v54, %v52
    %v63 = vpack.c.bf16 %v55, %v53
    %v64 = vld [vmem:[%s1] sm:$0xff]
    %v65 = vld [vmem:[%s1 + $0x8] sm:$0xff]
    %v66 = vld [vmem:[%s1 + $0x10] sm:$0xff]
    %v67 = vld [vmem:[%s1 + $0x18] sm:$0xff]
    %v68 = vld [vmem:[%s1 + $0x20] sm:$0xff]
    %v69 = vld [vmem:[%s1 + $0x28] sm:$0xff]
    %v70 = vld [vmem:[%s1 + $0x30] sm:$0xff]
    %v71 = vld [vmem:[%s1 + $0x38] sm:$0xff]
    %v72 = vld [vmem:[%s1 + $0x40] sm:$0xff]
    %v73 = vld [vmem:[%s1 + $0x48] sm:$0xff]
    %v74 = vld [vmem:[%s1 + $0x50] sm:$0xff]
    %v75 = vld [vmem:[%s1 + $0x58] sm:$0xff]
    %v76 = vld [vmem:[%s1 + $0x60] sm:$0xff]
    %v77 = vld [vmem:[%s1 + $0x68] sm:$0xff]
    %v78 = vld [vmem:[%s1 + $0x70] sm:$0xff]
    %v79 = vld [vmem:[%s1 + $0x78] sm:$0xff]
    %v80 = vld [vmem:[%s1 + $0x80] sm:$0xff]
    %v81 = vld [vmem:[%s1 + $0x88] sm:$0xff]
    %v82 = vld [vmem:[%s1 + $0x90] sm:$0xff]
    %v83 = vld [vmem:[%s1 + $0x98] sm:$0xff]
    %v84 = vld [vmem:[%s1 + $0xa0] sm:$0xff]
    %v85 = vld [vmem:[%s1 + $0xa8] sm:$0xff]
    %v86 = vld [vmem:[%s1 + $0xb0] sm:$0xff]
    %v87 = vld [vmem:[%s1 + $0xb8] sm:$0xff]
    %v88 = vld [vmem:[%s1 + $0xc0] sm:$0xff]
    %v89 = vld [vmem:[%s2] sm:$0x3]
    %v91 = vperm.slane %v89, 0
    %v92 = vperm.slane %v89, 1
    %v120 = vunpack.c.l.b16 %v64
    %v121 = vunpack.c.h.b16 %v64
    %v122 = vunpack.c.l.b16 %v65
    %v123 = vunpack.c.h.b16 %v65
    %v124 = vunpack.c.l.b16 %v66
    %v125 = vunpack.c.h.b16 %v66
    %v126 = vunpack.c.l.b16 %v67
    %v127 = vunpack.c.h.b16 %v67
    %v128 = vunpack.c.l.b16 %v68
    %v129 = vunpack.c.h.b16 %v68
    %v130 = vunpack.c.l.b16 %v69
    %v131 = vunpack.c.h.b16 %v69
    %v132 = vunpack.c.l.b16 %v70
    %v133 = vunpack.c.h.b16 %v70
    %v134 = vunpack.c.l.b16 %v71
    %v135 = vunpack.c.h.b16 %v71
    %v136 = vunpack.c.l.b16 %v72
    %v137 = vunpack.c.h.b16 %v72
    %v138 = vunpack.c.l.b16 %v73
    %v139 = vunpack.c.h.b16 %v73
    %v140 = vunpack.c.l.b16 %v74
    %v141 = vunpack.c.h.b16 %v74
    %v142 = vunpack.c.l.b16 %v75
    %v143 = vunpack.c.h.b16 %v75
    %v144 = vunpack.c.l.b16 %v76
    %v145 = vunpack.c.h.b16 %v76
    %v146 = vunpack.c.l.b16 %v77
    %v147 = vunpack.c.h.b16 %v77
    %v148 = vunpack.c.l.b16 %v78
    %v149 = vunpack.c.h.b16 %v78
    %v150 = vunpack.c.l.b16 %v79
    %v151 = vunpack.c.h.b16 %v79
    %v152 = vunpack.c.l.b16 %v80
    %v153 = vunpack.c.h.b16 %v80
    %v154 = vunpack.c.l.b16 %v81
    %v155 = vunpack.c.h.b16 %v81
    %v156 = vunpack.c.l.b16 %v82
    %v157 = vunpack.c.h.b16 %v82
    %v158 = vunpack.c.l.b16 %v83
    %v159 = vunpack.c.h.b16 %v83
    %v160 = vunpack.c.l.b16 %v84
    %v161 = vunpack.c.h.b16 %v84
    %v162 = vunpack.c.l.b16 %v85
    %v163 = vunpack.c.h.b16 %v85
    %v164 = vunpack.c.l.b16 %v86
    %v165 = vunpack.c.h.b16 %v86
    %v166 = vunpack.c.l.b16 %v87
    %v167 = vunpack.c.h.b16 %v87
    %v168 = vunpack.c.l.b16 %v88
    %v169 = vunpack.c.h.b16 %v88
    %v170 = vpack.c.b16 %v122, %v120
    %v171 = vpack.c.b16 %v123, %v121
    %v172 = vpack.c.b16 %v126, %v124
    %v173 = vpack.c.b16 %v127, %v125
    %v174 = vpack.c.b16 %v130, %v128
    %v175 = vpack.c.b16 %v131, %v129
    %v176 = vpack.c.b16 %v134, %v132
    %v177 = vpack.c.b16 %v135, %v133
    %v178 = vpack.c.b16 %v138, %v136
    %v179 = vpack.c.b16 %v139, %v137
    %v180 = vpack.c.b16 %v142, %v140
    %v181 = vpack.c.b16 %v143, %v141
    %v182 = vpack.c.b16 %v146, %v144
    %v183 = vpack.c.b16 %v147, %v145
    %v184 = vpack.c.b16 %v150, %v148
    %v185 = vpack.c.b16 %v151, %v149
    %v186 = vpack.c.b16 %v154, %v152
    %v187 = vpack.c.b16 %v155, %v153
    %v188 = vpack.c.b16 %v158, %v156
    %v189 = vpack.c.b16 %v159, %v157
    %v190 = vpack.c.b16 %v162, %v160
    %v191 = vpack.c.b16 %v163, %v161
    %v192 = vpack.c.b16 %v166, %v164
    %v193 = vpack.c.b16 %v167, %v165
    %v194 = vpack.c.b16 %v168, %v168
    %v195 = vpack.c.b16 %v169, %v169
    %vm220 = vcmask 588800
    %v222 = vsel %vm220, %v57, 0
    %v225 = vsel %vm220, %v59, 0
    %v228 = vsel %vm220, %v61, 0
    %v231 = vsel %vm220, %v63, 0
    %vm233 = vcmask 1043456
    %v235 = vsel %vm233, %v194, 0
    %v238 = vsel %vm233, %v195, 0
    %240 = vmatpush.bf16.msra.mxu0 %v184
    %241 = vmatpush.bf16.msra.mxu0 %v182
    %242 = vmatpush.bf16.msra.mxu0 %v180
    %243 = vmatpush.bf16.msra.mxu0 %v178
    %244 = vmatpush.bf16.msra.mxu0 %v176
    %245 = vmatpush.bf16.msra.mxu0 %v174
    %246 = vmatpush.bf16.msra.mxu0 %v172
    %247 = vmatpush.bf16.msra.mxu0 %v170
    %248 = vmatmul.bf16.gmra.mxu0 %v56
    %v249 = vpop.f32.mrf.mxu0
    %v250 = vadd.f32 %v91, %v249
    %v251 = vpop.f32.mrf.mxu0
    %v252 = vadd.f32 %v91, %v251
    %253 = vmatmul.bf16.gmra.mxu0 %v58
    %v254 = vpop.f32.mrf.mxu0
    %v255 = vadd.f32 %v91, %v254
    %v256 = vpop.f32.mrf.mxu0
    %v257 = vadd.f32 %v91, %v256
    %258 = vmatmul.bf16.gmra.mxu0 %v60
    %v259 = vpop.f32.mrf.mxu0
    %v260 = vadd.f32 %v91, %v259
    %v261 = vpop.f32.mrf.mxu0
    %v262 = vadd.f32 %v91, %v261
    %263 = vmatmul.bf16.gmra.mxu0 %v62
    %v264 = vpop.f32.mrf.mxu0
    %v265 = vadd.f32 %v91, %v264
    %v266 = vpop.f32.mrf.mxu0
    %v267 = vadd.f32 %v91, %v266
    %268 = vdwg.mxu0
    %269 = vmatpush.bf16.msra.mxu0 0
    %270 = vmatpush.bf16.msra.mxu0 0
    %271 = vmatpush.bf16.msra.mxu0 0
    %272 = vmatpush.bf16.msra.mxu0 %v235
    %273 = vmatpush.bf16.msra.mxu0 %v192
    %274 = vmatpush.bf16.msra.mxu0 %v190
    %275 = vmatpush.bf16.msra.mxu0 %v188
    %276 = vmatpush.bf16.msra.mxu0 %v186
    %277 = vmatmul.bf16.gmra.mxu0 %v222
    %v278 = vpop.f32.mrf.mxu0
    %v279 = vadd.f32 %v250, %v278
    %v280 = vpop.f32.mrf.mxu0
    %v281 = vadd.f32 %v252, %v280
    %282 = vmatmul.bf16.gmra.mxu0 %v225
    %v283 = vpop.f32.mrf.mxu0
    %v284 = vadd.f32 %v255, %v283
    %v285 = vpop.f32.mrf.mxu0
    %v286 = vadd.f32 %v257, %v285
    %287 = vmatmul.bf16.gmra.mxu0 %v228
    %v288 = vpop.f32.mrf.mxu0
    %v289 = vadd.f32 %v260, %v288
    %v290 = vpop.f32.mrf.mxu0
    %v291 = vadd.f32 %v262, %v290
    %292 = vmatmul.bf16.gmra.mxu0 %v231
    %v293 = vpop.f32.mrf.mxu0
    %v294 = vadd.f32 %v265, %v293
    %v295 = vpop.f32.mrf.mxu0
    %v296 = vadd.f32 %v267, %v295
    %297 = vdwg.mxu0
    %298 = vmatpush.bf16.msra.mxu0 %v185
    %299 = vmatpush.bf16.msra.mxu0 %v183
    %300 = vmatpush.bf16.msra.mxu0 %v181
    %301 = vmatpush.bf16.msra.mxu0 %v179
    %302 = vmatpush.bf16.msra.mxu0 %v177
    %303 = vmatpush.bf16.msra.mxu0 %v175
    %304 = vmatpush.bf16.msra.mxu0 %v173
    %305 = vmatpush.bf16.msra.mxu0 %v171
    %306 = vmatmul.bf16.gmra.mxu0 %v56
    %v307 = vpop.f32.mrf.mxu0
    %v308 = vadd.f32 %v92, %v307
    %v309 = vpop.f32.mrf.mxu0
    %v310 = vadd.f32 %v92, %v309
    %311 = vmatmul.bf16.gmra.mxu0 %v58
    %v312 = vpop.f32.mrf.mxu0
    %v313 = vadd.f32 %v92, %v312
    %v314 = vpop.f32.mrf.mxu0
    %v315 = vadd.f32 %v92, %v314
    %316 = vmatmul.bf16.gmra.mxu0 %v60
    %v317 = vpop.f32.mrf.mxu0
    %v318 = vadd.f32 %v92, %v317
    %v319 = vpop.f32.mrf.mxu0
    %v320 = vadd.f32 %v92, %v319
    %321 = vmatmul.bf16.gmra.mxu0 %v62
    %v322 = vpop.f32.mrf.mxu0
    %v323 = vadd.f32 %v92, %v322
    %v324 = vpop.f32.mrf.mxu0
    %v325 = vadd.f32 %v92, %v324
    %326 = vdwg.mxu0
    %327 = vmatpush.bf16.msra.mxu0 0
    %328 = vmatpush.bf16.msra.mxu0 0
    %329 = vmatpush.bf16.msra.mxu0 0
    %330 = vmatpush.bf16.msra.mxu0 %v238
    %331 = vmatpush.bf16.msra.mxu0 %v193
    %332 = vmatpush.bf16.msra.mxu0 %v191
    %333 = vmatpush.bf16.msra.mxu0 %v189
    %334 = vmatpush.bf16.msra.mxu0 %v187
    %335 = vmatmul.bf16.gmra.mxu0 %v222
    %v336 = vpop.f32.mrf.mxu0
    %v337 = vadd.f32 %v308, %v336
    %v338 = vpop.f32.mrf.mxu0
    %v339 = vadd.f32 %v310, %v338
    %340 = vmatmul.bf16.gmra.mxu0 %v225
    %v341 = vpop.f32.mrf.mxu0
    %v342 = vadd.f32 %v313, %v341
    %v343 = vpop.f32.mrf.mxu0
    %v344 = vadd.f32 %v315, %v343
    %345 = vmatmul.bf16.gmra.mxu0 %v228
    %v346 = vpop.f32.mrf.mxu0
    %v347 = vadd.f32 %v318, %v346
    %v348 = vpop.f32.mrf.mxu0
    %v349 = vadd.f32 %v320, %v348
    %350 = vmatmul.bf16.gmra.mxu0 %v231
    %v351 = vpop.f32.mrf.mxu0
    %v352 = vadd.f32 %v323, %v351
    %v353 = vpop.f32.mrf.mxu0
    %v354 = vadd.f32 %v325, %v353
    %355 = vdwg.mxu0
    %v356 = vmax.f32 %v279, 0.0
    %v357 = vmax.f32 %v337, 0.0
    %v358 = vmax.f32 %v281, 0.0
    %v359 = vmax.f32 %v339, 0.0
    %v360 = vmax.f32 %v284, 0.0
    %v361 = vmax.f32 %v342, 0.0
    %v362 = vmax.f32 %v286, 0.0
    %v363 = vmax.f32 %v344, 0.0
    %v364 = vmax.f32 %v289, 0.0
    %v365 = vmax.f32 %v347, 0.0
    %v366 = vmax.f32 %v291, 0.0
    %v367 = vmax.f32 %v349, 0.0
    %v368 = vmax.f32 %v294, 0.0
    %v369 = vmax.f32 %v352, 0.0
    %v370 = vmax.f32 %v296, 0.0
    %v371 = vmax.f32 %v354, 0.0
    %v372 = vpack.c.bf16 %v358, %v356
    %v373 = vpack.c.bf16 %v359, %v357
    %v374 = vpack.c.bf16 %v362, %v360
    %v375 = vpack.c.bf16 %v363, %v361
    %v376 = vpack.c.bf16 %v366, %v364
    %v377 = vpack.c.bf16 %v367, %v365
    %v378 = vpack.c.bf16 %v370, %v368
    %v379 = vpack.c.bf16 %v371, %v369
    %v380 = vld [vmem:[%s3] sm:$0xf]
    %v381 = vld [vmem:[%s3 + $0x4] sm:$0xf]
    %v382 = vld [vmem:[%s3 + $0x8] sm:$0xf]
    %v383 = vld [vmem:[%s3 + $0xc] sm:$0xf]
    %v384 = vld [vmem:[%s3 + $0x10] sm:$0xf]
    %v385 = vld [vmem:[%s3 + $0x14] sm:$0xf]
    %v386 = vld [vmem:[%s3 + $0x18] sm:$0xf]
    %v387 = vld [vmem:[%s3 + $0x1c] sm:$0xf]
    %v388 = vld [vmem:[%s3 + $0x20] sm:$0xf]
    %v389 = vld [vmem:[%s3 + $0x24] sm:$0xf]
    %v390 = vld [vmem:[%s3 + $0x28] sm:$0xf]
    %v391 = vld [vmem:[%s3 + $0x2c] sm:$0xf]
    %v392 = vld [vmem:[%s3 + $0x30] sm:$0xf]
    %v393 = vld [vmem:[%s3 + $0x34] sm:$0xf]
    %v394 = vld [vmem:[%s3 + $0x38] sm:$0xf]
    %v395 = vld [vmem:[%s3 + $0x3c] sm:$0xf]
    %v396 = vld [vmem:[%s3 + $0x40] sm:$0xf]
    %v397 = vld [vmem:[%s3 + $0x44] sm:$0xf]
    %v398 = vld [vmem:[%s3 + $0x48] sm:$0xf]
    %v399 = vld [vmem:[%s3 + $0x4c] sm:$0xf]
    %v400 = vld [vmem:[%s4] sm:$0x1]
    %v402 = vperm.slane %v400, 0
    %v424 = vunpack.c.l.b16 %v380
    %v425 = vunpack.c.l.b16 %v381
    %v426 = vunpack.c.l.b16 %v382
    %v427 = vunpack.c.l.b16 %v383
    %v428 = vunpack.c.l.b16 %v384
    %v429 = vunpack.c.l.b16 %v385
    %v430 = vunpack.c.l.b16 %v386
    %v431 = vunpack.c.l.b16 %v387
    %v432 = vunpack.c.l.b16 %v388
    %v433 = vunpack.c.l.b16 %v389
    %v434 = vunpack.c.l.b16 %v390
    %v435 = vunpack.c.l.b16 %v391
    %v436 = vunpack.c.l.b16 %v392
    %v437 = vunpack.c.l.b16 %v393
    %v438 = vunpack.c.l.b16 %v394
    %v439 = vunpack.c.l.b16 %v395
    %v440 = vunpack.c.l.b16 %v396
    %v441 = vunpack.c.l.b16 %v397
    %v442 = vunpack.c.l.b16 %v398
    %v443 = vunpack.c.l.b16 %v399
    %v444 = vpack.c.b16 %v425, %v424
    %v445 = vpack.c.b16 %v427, %v426
    %v446 = vpack.c.b16 %v429, %v428
    %v447 = vpack.c.b16 %v431, %v430
    %v448 = vpack.c.b16 %v433, %v432
    %v449 = vpack.c.b16 %v435, %v434
    %v450 = vpack.c.b16 %v437, %v436
    %v451 = vpack.c.b16 %v439, %v438
    %v452 = vpack.c.b16 %v441, %v440
    %v453 = vpack.c.b16 %v443, %v442
    %vm464 = vcmask 261120
    %v466 = vsel %vm464, %v373, 0
    %v469 = vsel %vm464, %v375, 0
    %v472 = vsel %vm464, %v377, 0
    %v475 = vsel %vm464, %v379, 0
    %477 = vmatpush.bf16.msra.mxu0 %v451
    %478 = vmatpush.bf16.msra.mxu0 %v450
    %479 = vmatpush.bf16.msra.mxu0 %v449
    %480 = vmatpush.bf16.msra.mxu0 %v448
    %481 = vmatpush.bf16.msra.mxu0 %v447
    %482 = vmatpush.bf16.msra.mxu0 %v446
    %483 = vmatpush.bf16.msra.mxu0 %v445
    %484 = vmatpush.bf16.msra.mxu0 %v444
    %485 = vmatmul.bf16.gmra.mxu0 %v372
    %v486 = vpop.f32.mrf.mxu0
    %v487 = vadd.f32 %v402, %v486
    %v488 = vpop.f32.mrf.mxu0
    %v489 = vadd.f32 %v402, %v488
    %490 = vmatmul.bf16.gmra.mxu0 %v374
    %v491 = vpop.f32.mrf.mxu0
    %v492 = vadd.f32 %v402, %v491
    %v493 = vpop.f32.mrf.mxu0
    %v494 = vadd.f32 %v402, %v493
    %495 = vmatmul.bf16.gmra.mxu0 %v376
    %v496 = vpop.f32.mrf.mxu0
    %v497 = vadd.f32 %v402, %v496
    %v498 = vpop.f32.mrf.mxu0
    %v499 = vadd.f32 %v402, %v498
    %500 = vmatmul.bf16.gmra.mxu0 %v378
    %v501 = vpop.f32.mrf.mxu0
    %v502 = vadd.f32 %v402, %v501
    %v503 = vpop.f32.mrf.mxu0
    %v504 = vadd.f32 %v402, %v503
    %505 = vdwg.mxu0
    %506 = vmatpush.bf16.msra.mxu0 0
    %507 = vmatpush.bf16.msra.mxu0 0
    %508 = vmatpush.bf16.msra.mxu0 0
    %509 = vmatpush.bf16.msra.mxu0 0
    %510 = vmatpush.bf16.msra.mxu0 0
    %511 = vmatpush.bf16.msra.mxu0 0
    %512 = vmatpush.bf16.msra.mxu0 %v453
    %513 = vmatpush.bf16.msra.mxu0 %v452
    %514 = vmatmul.bf16.gmra.mxu0 %v466
    %v515 = vpop.f32.mrf.mxu0
    %v516 = vadd.f32 %v487, %v515
    %v517 = vpop.f32.mrf.mxu0
    %v518 = vadd.f32 %v489, %v517
    %519 = vmatmul.bf16.gmra.mxu0 %v469
    %v520 = vpop.f32.mrf.mxu0
    %v521 = vadd.f32 %v492, %v520
    %v522 = vpop.f32.mrf.mxu0
    %v523 = vadd.f32 %v494, %v522
    %524 = vmatmul.bf16.gmra.mxu0 %v472
    %v525 = vpop.f32.mrf.mxu0
    %v526 = vadd.f32 %v497, %v525
    %v527 = vpop.f32.mrf.mxu0
    %v528 = vadd.f32 %v499, %v527
    %529 = vmatmul.bf16.gmra.mxu0 %v475
    %v530 = vpop.f32.mrf.mxu0
    %v531 = vadd.f32 %v502, %v530
    %v532 = vpop.f32.mrf.mxu0
    %v533 = vadd.f32 %v504, %v532
    %534 = vdwg.mxu0
    %v535 = vmax.f32 %v516, 0.0
    %v536 = vmax.f32 %v518, 0.0
    %v537 = vmax.f32 %v521, 0.0
    %v538 = vmax.f32 %v523, 0.0
    %v539 = vmax.f32 %v526, 0.0
    %v540 = vmax.f32 %v528, 0.0
    %v541 = vmax.f32 %v531, 0.0
    %v542 = vmax.f32 %v533, 0.0
    %v543 = vpack.c.bf16 %v536, %v535
    %v544 = vpack.c.bf16 %v538, %v537
    %v545 = vpack.c.bf16 %v540, %v539
    %v546 = vpack.c.bf16 %v542, %v541
    %v547 = vld [vmem:[%s5] sm:$0xf]
    %v548 = vld [vmem:[%s5 + $0x4] sm:$0xf]
    %v549 = vld [vmem:[%s5 + $0x8] sm:$0xf]
    %v550 = vld [vmem:[%s5 + $0xc] sm:$0xf]
    %v551 = vld [vmem:[%s5 + $0x10] sm:$0xf]
    %v552 = vld [vmem:[%s5 + $0x14] sm:$0xf]
    %v553 = vld [vmem:[%s5 + $0x18] sm:$0xf]
    %v554 = vld [vmem:[%s5 + $0x1c] sm:$0xf]
    %v555 = vld [vmem:[%s5 + $0x20] sm:$0xf]
    %v556 = vld [vmem:[%s5 + $0x24] sm:$0xf]
    %v557 = vld [vmem:[%s6] sm:$0x1]
    %v559 = vperm.slane %v557, 0
    %v571 = vunpack.c.l.b16 %v547
    %v572 = vunpack.c.l.b16 %v548
    %v573 = vunpack.c.l.b16 %v549
    %v574 = vunpack.c.l.b16 %v550
    %v575 = vunpack.c.l.b16 %v551
    %v576 = vunpack.c.l.b16 %v552
    %v577 = vunpack.c.l.b16 %v553
    %v578 = vunpack.c.l.b16 %v554
    %v579 = vunpack.c.l.b16 %v555
    %v580 = vunpack.c.l.b16 %v556
    %v581 = vpack.c.b16 %v572, %v571
    %v582 = vpack.c.b16 %v574, %v573
    %v583 = vpack.c.b16 %v576, %v575
    %v584 = vpack.c.b16 %v578, %v577
    %v585 = vpack.c.b16 %v580, %v579
    %vm591 = vcmask 654336
    %v593 = vsel %vm591, %v543, 0
    %v596 = vsel %vm591, %v544, 0
    %v599 = vsel %vm591, %v545, 0
    %v602 = vsel %vm591, %v546, 0
    %604 = vmatpush.bf16.msra.mxu0 0
    %605 = vmatpush.bf16.msra.mxu0 0
    %606 = vmatpush.bf16.msra.mxu0 0
    %607 = vmatpush.bf16.msra.mxu0 %v585
    %608 = vmatpush.bf16.msra.mxu0 %v584
    %609 = vmatpush.bf16.msra.mxu0 %v583
    %610 = vmatpush.bf16.msra.mxu0 %v582
    %611 = vmatpush.bf16.msra.mxu0 %v581
    %612 = vmatmul.bf16.gmra.mxu0 %v593
    %v613 = vpop.f32.mrf.mxu0
    %v614 = vadd.f32 %v559, %v613
    %v615 = vpop.f32.mrf.mxu0
    %v616 = vadd.f32 %v559, %v615
    %617 = vmatmul.bf16.gmra.mxu0 %v596
    %v618 = vpop.f32.mrf.mxu0
    %v619 = vadd.f32 %v559, %v618
    %v620 = vpop.f32.mrf.mxu0
    %v621 = vadd.f32 %v559, %v620
    %622 = vmatmul.bf16.gmra.mxu0 %v599
    %v623 = vpop.f32.mrf.mxu0
    %v624 = vadd.f32 %v559, %v623
    %v625 = vpop.f32.mrf.mxu0
    %v626 = vadd.f32 %v559, %v625
    %627 = vmatmul.bf16.gmra.mxu0 %v602
    %v628 = vpop.f32.mrf.mxu0
    %v629 = vadd.f32 %v559, %v628
    %v630 = vpop.f32.mrf.mxu0
    %v631 = vadd.f32 %v559, %v630
    %632 = vdwg.mxu0
    %v633 = vmax.f32 %v614, 0.0
    %v634 = vmax.f32 %v616, 0.0
    %v635 = vmax.f32 %v619, 0.0
    %v636 = vmax.f32 %v621, 0.0
    %v637 = vmax.f32 %v624, 0.0
    %v638 = vmax.f32 %v626, 0.0
    %v639 = vmax.f32 %v629, 0.0
    %v640 = vmax.f32 %v631, 0.0
    %v641 = vpack.c.bf16 %v634, %v633
    %v642 = vpack.c.bf16 %v636, %v635
    %v643 = vpack.c.bf16 %v638, %v637
    %v644 = vpack.c.bf16 %v640, %v639
    %v645 = vld [vmem:[%s7] sm:$0xf]
    %v646 = vld [vmem:[%s7 + $0x4] sm:$0xf]
    %v647 = vld [vmem:[%s7 + $0x8] sm:$0x3]
    %v648 = vld [vmem:[%s8] sm:$0x1]
    %v650 = vperm.slane %v648, 0
    %v655 = vunpack.c.l.b16 %v645
    %v656 = vunpack.c.l.b16 %v646
    %v657 = vunpack.c.l.b16 %v647
    %v658 = vpack.c.b16 %v656, %v655
    %v659 = vpack.c.b16 %v657, %v657
    %vm661 = vcmask 162816
    %v663 = vsel %vm661, %v641, 0
    %v666 = vsel %vm661, %v642, 0
    %v669 = vsel %vm661, %v643, 0
    %v672 = vsel %vm661, %v644, 0
    %vm674 = vcmask 1041408
    %v676 = vsel %vm674, %v659, 0
    %678 = vmatpush.bf16.msra.mxu0 0
    %679 = vmatpush.bf16.msra.mxu0 0
    %680 = vmatpush.bf16.msra.mxu0 0
    %681 = vmatpush.bf16.msra.mxu0 0
    %682 = vmatpush.bf16.msra.mxu0 0
    %683 = vmatpush.bf16.msra.mxu0 0
    %684 = vmatpush.bf16.msra.mxu0 %v676
    %685 = vmatpush.bf16.msra.mxu0 %v658
    %686 = vmatmul.bf16.gmra.mxu0 %v663
    %v687 = vpop.f32.mrf.mxu0
    %v688 = vadd.f32 %v650, %v687
    %v689 = vpop.f32.mrf.mxu0
    %v690 = vadd.f32 %v650, %v689
    %691 = vmatmul.bf16.gmra.mxu0 %v666
    %v692 = vpop.f32.mrf.mxu0
    %v693 = vadd.f32 %v650, %v692
    %v694 = vpop.f32.mrf.mxu0
    %v695 = vadd.f32 %v650, %v694
    %696 = vmatmul.bf16.gmra.mxu0 %v669
    %v697 = vpop.f32.mrf.mxu0
    %v698 = vadd.f32 %v650, %v697
    %v699 = vpop.f32.mrf.mxu0
    %v700 = vadd.f32 %v650, %v699
    %701 = vmatmul.bf16.gmra.mxu0 %v672
    %v702 = vpop.f32.mrf.mxu0
    %v703 = vadd.f32 %v650, %v702
    %v704 = vpop.f32.mrf.mxu0
    %v705 = vadd.f32 %v650, %v704
    %706 = vdwg.mxu0
    %v707 = vmax.f32 %v688, 0.0
    %v708 = vmax.f32 %v690, 0.0
    %v709 = vmax.f32 %v693, 0.0
    %v710 = vmax.f32 %v695, 0.0
    %v711 = vmax.f32 %v698, 0.0
    %v712 = vmax.f32 %v700, 0.0
    %v713 = vmax.f32 %v703, 0.0
    %v714 = vmax.f32 %v705, 0.0
    %v715 = vpack.c.bf16 %v708, %v707
    %v716 = vpack.c.bf16 %v710, %v709
    %v717 = vpack.c.bf16 %v712, %v711
    %v718 = vpack.c.bf16 %v714, %v713
    %v719 = vld [vmem:[%s9] sm:$0x1]
    %v720 = vld [vmem:[%s10] sm:$0x1]
    %v722 = vperm.slane %v720, 0
    %vm724 = vcmask 15360
    %v726 = vsel %vm724, %v715, 0
    %v729 = vsel %vm724, %v716, 0
    %v732 = vsel %vm724, %v717, 0
    %v735 = vsel %vm724, %v718, 0
    %vm737 = vcmask 1040384
    %v739 = vsel %vm737, %v719, 0
    %741 = vmatpush.bf16.msra.mxu0 0
    %742 = vmatpush.bf16.msra.mxu0 0
    %743 = vmatpush.bf16.msra.mxu0 0
    %744 = vmatpush.bf16.msra.mxu0 0
    %745 = vmatpush.bf16.msra.mxu0 0
    %746 = vmatpush.bf16.msra.mxu0 0
    %747 = vmatpush.bf16.msra.mxu0 0
    %748 = vmatpush.bf16.msra.mxu0 %v739
    %749 = vmatmul.bf16.gmra.mxu0 %v726
    %v750 = vpop.f32.mrf.mxu0
    %v751 = vadd.f32 %v722, %v750
    %v752 = vpop.f32.mrf.mxu0
    %v753 = vadd.f32 %v722, %v752
    %754 = vmatmul.bf16.gmra.mxu0 %v729
    %v755 = vpop.f32.mrf.mxu0
    %v756 = vadd.f32 %v722, %v755
    %v757 = vpop.f32.mrf.mxu0
    %v758 = vadd.f32 %v722, %v757
    %759 = vmatmul.bf16.gmra.mxu0 %v732
    %v760 = vpop.f32.mrf.mxu0
    %v761 = vadd.f32 %v722, %v760
    %v762 = vpop.f32.mrf.mxu0
    %v763 = vadd.f32 %v722, %v762
    %764 = vmatmul.bf16.gmra.mxu0 %v735
    %v765 = vpop.f32.mrf.mxu0
    %v766 = vadd.f32 %v722, %v765
    %v767 = vpop.f32.mrf.mxu0
    %v768 = vadd.f32 %v722, %v767
    %769 = vdwg.mxu0
    %770 = vst [vmem:[#allocation2] sm:$0xff] %v751
    %771 = vst [vmem:[#allocation2 + $0x8] sm:$0xff] %v753
    %772 = vst [vmem:[#allocation2 + $0x10] sm:$0xff] %v756
    %773 = vst [vmem:[#allocation2 + $0x18] sm:$0xff] %v758
    %774 = vst [vmem:[#allocation2 + $0x20] sm:$0xff] %v761
    %775 = vst [vmem:[#allocation2 + $0x28] sm:$0xff] %v763
    %776 = vst [vmem:[#allocation2 + $0x30] sm:$0xff] %v766
    %777 = vst [vmem:[#allocation2 + $0x38] sm:$0xff] %v768
    // Predicated region
    $region46: #{tpu_custom_call.1} parent=1 // pred_check
      _
    $region47: #{tpu_custom_call.1} parent=1 // pred_check_branch
      %779 = sbr.rel (0) target = $region49
    $region48: #{tpu_custom_call.1} parent=1 // pred_region
      %781 = vsyncadd [#allocation3], 0
      %s782 = sshll.u32 [#allocation2], 4
      %s783 = int_to_ptr.vmem [resolvable:$true] %s782
      %s784 = sshll.u32 %s11, 4
      %s785 = int_to_ptr.hbm [resolvable:$true] %s784
      %790 = dma.vmem_to_hbm [thread:$0]  %s783, 1024, %s785, [#allocation3], 128, 128, 8
    $region49: #{tpu_custom_call.1} parent=1 // pred_fallthru
      _
    // Predicated region
    $region50: #{tpu_custom_call.1} parent=1 // pred_check
      _
    $region51: #{tpu_custom_call.1} parent=1 // pred_check_branch
      %792 = sbr.rel (0) target = $region53
    $region52: #{tpu_custom_call.1} parent=1 // pred_region
      %794 = dma.done [#allocation3], 1024
    $region53: #{tpu_custom_call.1} parent=1 // pred_fallthru
      _
    %795 = vsyncpa [#allocation3], 1

</llo_original>
